<compile_context>
chip_gen: v7x
topology: tpu7x:2x2x1
jax: 0.10.0
libtpu: 0.0.40
codegen_flags: <defaults>
</compile_context>

<pallas_src>
import functools

import jax
import jax.numpy as jnp
from jax.experimental import pallas as pl
from jax.experimental.pallas import tpu as pltpu


# ----------------------------------------------------------------------------
# Generation-aware resource sizing (v5e/v6e: 128 MiB VMEM, v7x: 64 MiB).
# ----------------------------------------------------------------------------
def _vmem_capacity_bytes():
    try:
        return int(pltpu.get_tpu_info().vmem_capacity_bytes)
    except Exception:
        # Conservative fallback that is safe on every generation (incl. v7x).
        return 64 * 1024 * 1024


_VMEM_CAP = _vmem_capacity_bytes()
_VMEM_LIMIT = min((_VMEM_CAP * 3) // 4, 100 * 1024 * 1024)
_MLP_ROW_TILE = 512 if _VMEM_CAP >= 100 * 1024 * 1024 else 256
_LN_ROW_TILE = 1024 if _VMEM_CAP >= 100 * 1024 * 1024 else 512


# ----------------------------------------------------------------------------
# Kernels
# ----------------------------------------------------------------------------
def _attn_block_kernel(*refs, num_heads, eps, has_pos):
    # Fused:  x(+pos) -> LN1 -> QKV -> batched MHA -> out-proj -> +residual
    if has_pos:
        (x_ref, pos_ref, g_ref, b_ref, wqkv_ref, bqkv_ref,
         wo_ref, bo_ref, o_ref) = refs
    else:
        (x_ref, g_ref, b_ref, wqkv_ref, bqkv_ref,
         wo_ref, bo_ref, o_ref) = refs
        pos_ref = None

    x = x_ref[0].astype(jnp.float32)                        # (S, D) residual
    if has_pos:
        x = x + pos_ref[0].astype(jnp.float32)
    S, D = x.shape
    dh = D // num_heads

    # --- LayerNorm 1 (f32 statistics) ---
    mean = jnp.mean(x, axis=-1, keepdims=True)
    var = jnp.mean(jnp.square(x - mean), axis=-1, keepdims=True)
    h = (x - mean) * jax.lax.rsqrt(var + eps)
    h = h * g_ref[...].astype(jnp.float32) + b_ref[...].astype(jnp.float32)

    # --- QKV projection (bf16 operands, f32 accumulation on the MXU).
    #     The 1/sqrt(dh) query scale is already folded into wqkv / bqkv. ---
    qkv = jnp.dot(h.astype(jnp.bfloat16), wqkv_ref[...],
                  preferred_element_type=jnp.float32)
    qkv = (qkv + bqkv_ref[...].astype(jnp.float32)).astype(jnp.bfloat16)  # one cast

    # --- head-major layout (H, S, dh); all heads processed in one batched
    #     dot_general (no per-head masked slices/stores, no explicit K.T). ---
    q = jnp.transpose(qkv[:, :D].reshape(S, num_heads, dh), (1, 0, 2))
    k = jnp.transpose(qkv[:, D:2 * D].reshape(S, num_heads, dh), (1, 0, 2))
    v = jnp.transpose(qkv[:, 2 * D:].reshape(S, num_heads, dh), (1, 0, 2))

    # scores: contract last dims, batch over heads -> (H, S, S) f32
    s = jax.lax.dot_general(q, k, (((2,), (2,)), ((0,), (0,))),
                            preferred_element_type=jnp.float32)
    s = s - jnp.max(s, axis=-1, keepdims=True)
    p = jnp.exp(s)
    p = p * pl.reciprocal(jnp.sum(p, axis=-1, keepdims=True), approx=True)

    # context: (H, S, dh) f32 accumulate, then back to (S, D) bf16 for out-proj
    ctx = jax.lax.dot_general(p.astype(jnp.bfloat16), v,
                              (((2,), (1,)), ((0,), (0,))),
                              preferred_element_type=jnp.float32)
    ctx = jnp.transpose(ctx.astype(jnp.bfloat16), (1, 0, 2)).reshape(S, D)

    # --- output projection + residual ---
    out = jnp.dot(ctx, wo_ref[...], preferred_element_type=jnp.float32)
    out = out + bo_ref[...].astype(jnp.float32)
    o_ref[0] = (out + x).astype(o_ref.dtype)


def _mlp_block_kernel(*refs, eps, has_final_ln):
    # Fused:  LN2 -> Linear -> GELU(erf) -> Linear -> +residual
    #         [-> final LayerNorm epilogue on the last encoder layer]
    if has_final_ln:
        (x_ref, g_ref, b_ref, w1_ref, b1_ref, w2_ref, b2_ref,
         gf_ref, bf_ref, o_ref) = refs
    else:
        (x_ref, g_ref, b_ref, w1_ref, b1_ref, w2_ref, b2_ref, o_ref) = refs

    x = x_ref[...].astype(jnp.float32)                      # (TR, D)
    mean = jnp.mean(x, axis=-1, keepdims=True)
    var = jnp.mean(jnp.square(x - mean), axis=-1, keepdims=True)
    y = (x - mean) * jax.lax.rsqrt(var + eps)
    y = y * g_ref[...].astype(jnp.float32) + b_ref[...].astype(jnp.float32)

    h = jnp.dot(y.astype(jnp.bfloat16), w1_ref[...],
                preferred_element_type=jnp.float32) + b1_ref[...].astype(jnp.float32)
    # exact GELU (nn.GELU default, approximate='none')
    h = 0.5 * h * (1.0 + jax.lax.erf(h * 0.7071067811865476))

    z = jnp.dot(h.astype(jnp.bfloat16), w2_ref[...],
                preferred_element_type=jnp.float32) + b2_ref[...].astype(jnp.float32)
    out = z + x

    if has_final_ln:
        m2 = jnp.mean(out, axis=-1, keepdims=True)
        v2 = jnp.mean(jnp.square(out - m2), axis=-1, keepdims=True)
        out = (out - m2) * jax.lax.rsqrt(v2 + eps)
        out = (out * gf_ref[...].astype(jnp.float32)
               + bf_ref[...].astype(jnp.float32))

    o_ref[...] = out.astype(o_ref.dtype)


def _layernorm_kernel(x_ref, g_ref, b_ref, o_ref, *, eps):
    x = x_ref[...].astype(jnp.float32)
    mean = jnp.mean(x, axis=-1, keepdims=True)
    var = jnp.mean(jnp.square(x - mean), axis=-1, keepdims=True)
    y = (x - mean) * jax.lax.rsqrt(var + eps)
    o_ref[...] = (y * g_ref[...].astype(jnp.float32)
                  + b_ref[...].astype(jnp.float32)).astype(o_ref.dtype)


# ----------------------------------------------------------------------------
# Pallas-call wrappers
# ----------------------------------------------------------------------------
def attn_block(x, pos, ln_g, ln_b, wqkv, bqkv, wo, bo, num_heads, eps=1e-6):
    B, S, D = x.shape
    assert D % num_heads == 0, "hidden_dim must be divisible by num_heads"
    has_pos = pos is not None

    in_specs = [pl.BlockSpec((1, S, D), lambda b: (b, 0, 0))]
    args = [x]
    if has_pos:
        in_specs.append(pl.BlockSpec((1, S, D), lambda b: (0, 0, 0)))
        args.append(pos)
    in_specs += [
        pl.BlockSpec((1, D), lambda b: (0, 0)),
        pl.BlockSpec((1, D), lambda b: (0, 0)),
        pl.BlockSpec((D, 3 * D), lambda b: (0, 0)),
        pl.BlockSpec((1, 3 * D), lambda b: (0, 0)),
        pl.BlockSpec((D, D), lambda b: (0, 0)),
        pl.BlockSpec((1, D), lambda b: (0, 0)),
    ]
    args += [ln_g.reshape(1, D), ln_b.reshape(1, D), wqkv,
             bqkv.reshape(1, 3 * D), wo, bo.reshape(1, D)]

    return pl.pallas_call(
        functools.partial(_attn_block_kernel, num_heads=num_heads, eps=eps,
                          has_pos=has_pos),
        out_shape=jax.ShapeDtypeStruct((B, S, D), x.dtype),
        grid=(B,),
        in_specs=in_specs,
        out_specs=pl.BlockSpec((1, S, D), lambda b: (b, 0, 0)),
        compiler_params=pltpu.CompilerParams(
            dimension_semantics=("parallel",),
            vmem_limit_bytes=_VMEM_LIMIT),
    )(*args)


def mlp_block(x2d, ln_g, ln_b, w1, b1, w2, b2, final_g=None, final_b=None,
              eps=1e-6, row_tile=_MLP_ROW_TILE):
    R, D = x2d.shape
    M = w1.shape[1]
    tr = R if R <= row_tile else row_tile
    has_final_ln = final_g is not None

    in_specs = [pl.BlockSpec((tr, D), lambda i: (i, 0)),
                pl.BlockSpec((1, D), lambda i: (0, 0)),
                pl.BlockSpec((1, D), lambda i: (0, 0)),
                pl.BlockSpec((D, M), lambda i: (0, 0)),
                pl.BlockSpec((1, M), lambda i: (0, 0)),
                pl.BlockSpec((M, D), lambda i: (0, 0)),
                pl.BlockSpec((1, D), lambda i: (0, 0))]
    args = [x2d, ln_g.reshape(1, D), ln_b.reshape(1, D),
            w1, b1.reshape(1, M), w2, b2.reshape(1, D)]
    if has_final_ln:
        in_specs += [pl.BlockSpec((1, D), lambda i: (0, 0)),
                     pl.BlockSpec((1, D), lambda i: (0, 0))]
        args += [final_g.reshape(1, D), final_b.reshape(1, D)]

    return pl.pallas_call(
        functools.partial(_mlp_block_kernel, eps=eps,
                          has_final_ln=has_final_ln),
        out_shape=jax.ShapeDtypeStruct((R, D), x2d.dtype),
        grid=(pl.cdiv(R, tr),),
        in_specs=in_specs,
        out_specs=pl.BlockSpec((tr, D), lambda i: (i, 0)),
        compiler_params=pltpu.CompilerParams(
            dimension_semantics=("parallel",),
            vmem_limit_bytes=_VMEM_LIMIT),
    )(*args)


def layernorm(x2d, gamma, beta, eps=1e-6, row_tile=_LN_ROW_TILE):
    R, D = x2d.shape
    tr = R if R <= row_tile else row_tile
    return pl.pallas_call(
        functools.partial(_layernorm_kernel, eps=eps),
        out_shape=jax.ShapeDtypeStruct((R, D), x2d.dtype),
        grid=(pl.cdiv(R, tr),),
        in_specs=[pl.BlockSpec((tr, D), lambda i: (i, 0)),
                  pl.BlockSpec((1, D), lambda i: (0, 0)),
                  pl.BlockSpec((1, D), lambda i: (0, 0))],
        out_specs=pl.BlockSpec((tr, D), lambda i: (i, 0)),
        compiler_params=pltpu.CompilerParams(
            dimension_semantics=("parallel",),
            vmem_limit_bytes=_VMEM_LIMIT),
    )(x2d, gamma.reshape(1, D), beta.reshape(1, D))


# ----------------------------------------------------------------------------
# Encoder forward
# ----------------------------------------------------------------------------
def encoder_forward(x, params, num_heads):
    assert x.ndim == 3, f"Expected (batch_size, seq_length, hidden_dim) got {x.shape}"
    B, S, D = x.shape
    assert D % num_heads == 0, "hidden_dim must be divisible by num_heads"
    pos = params["pos_embedding"]
    layers = params["layers"]
    # TODO(synk): nn.Dropout layers run in eval mode -> identity (no RNG masking).

    if not layers:                       # degenerate case: pos embedding + final LN
        x = x + pos
        return layernorm(x.reshape(B * S, D),
                         params["ln_g"], params["ln_b"]).reshape(B, S, D)

    n = len(layers)
    for i, lp in enumerate(layers):
        # attention sub-block (pos embedding fused into the first layer's kernel)
        x = attn_block(x, pos if i == 0 else None,
                       lp["ln1_g"], lp["ln1_b"],
                       lp["wqkv"], lp["bqkv"], lp["wo"], lp["bo"],
                       num_heads)
        # MLP sub-block (row-tiled, LN2 fused; final encoder LN fused into the
        # last layer's kernel as an epilogue -> one fewer HBM round trip)
        is_last = (i == n - 1)
        x = mlp_block(x.reshape(B * S, D),
                      lp["ln2_g"], lp["ln2_b"],
                      lp["w1"], lp["b1"], lp["w2"], lp["b2"],
                      final_g=params["ln_g"] if is_last else None,
                      final_b=params["ln_b"] if is_last else None,
                      ).reshape(B, S, D)
    return x


# ----------------------------------------------------------------------------
# Deterministic parameter initialization (synthetic weights)
#   * Linear weights pre-transposed to (in, out) and stored in bf16.
#   * The 1/sqrt(head_dim) attention scale is folded into the Q-third of
#     wqkv / bqkv so the kernel performs no per-head scaling.
# ----------------------------------------------------------------------------
def init_encoder_params(key, seq_length, num_layers, num_heads, hidden_dim, mlp_dim):
    assert hidden_dim % num_heads == 0, "hidden_dim must be divisible by num_heads"
    dh = hidden_dim // num_heads
    q_scale = 1.0 / (dh ** 0.5)

    keys = jax.random.split(key, 1 + max(num_layers, 1))
    params = {
        "pos_embedding": 0.02 * jax.random.normal(
            keys[0], (1, seq_length, hidden_dim), jnp.float32),
        "ln_g": jnp.ones((hidden_dim,), jnp.float32),
        "ln_b": jnp.zeros((hidden_dim,), jnp.float32),
        "layers": [],
    }
    for i in range(num_layers):
        k = jax.random.split(keys[1 + i], 4)
        wqkv = 0.02 * jax.random.normal(
            k[0], (hidden_dim, 3 * hidden_dim), jnp.float32)
        bqkv = jnp.zeros((3 * hidden_dim,), jnp.float32)
        # Fold the attention query scale into the Q projection (weight + bias).
        wqkv = wqkv.at[:, :hidden_dim].multiply(q_scale)
        bqkv = bqkv.at[:hidden_dim].multiply(q_scale)
        params["layers"].append({
            "ln1_g": jnp.ones((hidden_dim,), jnp.float32),
            "ln1_b": jnp.zeros((hidden_dim,), jnp.float32),
            "wqkv": wqkv.astype(jnp.bfloat16),
            "bqkv": bqkv,
            "wo": (0.02 * jax.random.normal(
                k[1], (hidden_dim, hidden_dim), jnp.float32)).astype(jnp.bfloat16),
            "bo": jnp.zeros((hidden_dim,), jnp.float32),
            "ln2_g": jnp.ones((hidden_dim,), jnp.float32),
            "ln2_b": jnp.zeros((hidden_dim,), jnp.float32),
            "w1": (0.02 * jax.random.normal(
                k[2], (hidden_dim, mlp_dim), jnp.float32)).astype(jnp.bfloat16),
            "b1": jnp.zeros((mlp_dim,), jnp.float32),
            "w2": (0.02 * jax.random.normal(
                k[3], (mlp_dim, hidden_dim), jnp.float32)).astype(jnp.bfloat16),
            "b2": jnp.zeros((hidden_dim,), jnp.float32),
        })
    return params


if __name__ == "__main__":
    # Small, module-consistent shapes.
    batch = 2
    seq_length = 8
    num_layers = 2
    num_heads = 4
    hidden_dim = 32
    mlp_dim = 64

    root = jax.random.PRNGKey(0)
    k_x, k_p = jax.random.split(root)

    x = jax.random.normal(k_x, (batch, seq_length, hidden_dim), jnp.float32)
    params = init_encoder_params(k_p, seq_length, num_layers, num_heads,
                                 hidden_dim, mlp_dim)

    out = encoder_forward(x, params, num_heads)
    out = jax.block_until_ready(out)
    assert out.shape == (batch, seq_length, hidden_dim)
    assert bool(jnp.all(jnp.isfinite(out)))
    print("KERNEL_OK")
</pallas_src>

<mosaic_0001>
module attributes {stable_mosaic.version = 11 : i64} {
  func.func @_attn_block_kernel(%arg0: i32, %arg1: memref<1x8x32xf32, #tpu.memory_space<vmem>>, %arg2: memref<1x8x32xf32, #tpu.memory_space<vmem>>, %arg3: memref<1x32xf32, #tpu.memory_space<vmem>>, %arg4: memref<1x32xf32, #tpu.memory_space<vmem>>, %arg5: memref<32x96xbf16, #tpu.memory_space<vmem>>, %arg6: memref<1x96xf32, #tpu.memory_space<vmem>>, %arg7: memref<32x32xbf16, #tpu.memory_space<vmem>>, %arg8: memref<1x32xf32, #tpu.memory_space<vmem>>, %arg9: memref<1x8x32xf32, #tpu.memory_space<vmem>>) attributes {dimension_semantics = [#tpu.dimension_semantics<parallel>], iteration_bounds = array<i64: 2>, scalar_prefetch = 0 : i64, scratch_operands = 0 : i64, tpu.core_type = #tpu.core_type<tc>, window_params = [{transform_indices = @transform_0, window_bounds = array<i64: 1, 8, 32>}, {pipeline_mode = #tpu.pipeline_mode<synchronous>, transform_indices = @transform_1, window_bounds = array<i64: 1, 8, 32>}, {pipeline_mode = #tpu.pipeline_mode<synchronous>, transform_indices = @transform_2, window_bounds = array<i64: 1, 32>}, {pipeline_mode = #tpu.pipeline_mode<synchronous>, transform_indices = @transform_3, window_bounds = array<i64: 1, 32>}, {pipeline_mode = #tpu.pipeline_mode<synchronous>, transform_indices = @transform_4, window_bounds = array<i64: 32, 96>}, {pipeline_mode = #tpu.pipeline_mode<synchronous>, transform_indices = @transform_5, window_bounds = array<i64: 1, 96>}, {pipeline_mode = #tpu.pipeline_mode<synchronous>, transform_indices = @transform_6, window_bounds = array<i64: 32, 32>}, {pipeline_mode = #tpu.pipeline_mode<synchronous>, transform_indices = @transform_7, window_bounds = array<i64: 1, 32>}, {transform_indices = @transform_8, window_bounds = array<i64: 1, 8, 32>}]} {
    %c0 = arith.constant 0 : index
    %c0_0 = arith.constant 0 : index
    %c0_1 = arith.constant 0 : index
    %0 = vector.load %arg1[%c0, %c0_0, %c0_1] : memref<1x8x32xf32, #tpu.memory_space<vmem>>, vector<1x8x32xf32>
    %1 = vector.shape_cast %0 : vector<1x8x32xf32> to vector<8x32xf32>
    %c0_2 = arith.constant 0 : index
    %c0_3 = arith.constant 0 : index
    %c0_4 = arith.constant 0 : index
    %2 = vector.load %arg2[%c0_2, %c0_3, %c0_4] : memref<1x8x32xf32, #tpu.memory_space<vmem>>, vector<1x8x32xf32>
    %3 = vector.shape_cast %2 : vector<1x8x32xf32> to vector<8x32xf32>
    %4 = arith.addf %1, %3 : vector<8x32xf32>
    %cst = arith.constant dense<0.000000e+00> : vector<8xf32>
    %5 = vector.multi_reduction <add>, %4, %cst [1] : vector<8x32xf32> to vector<8xf32>
    %6 = vector.shape_cast %5 : vector<8xf32> to vector<8x1xf32>
    %cst_5 = arith.constant 3.200000e+01 : f32
    %7 = vector.broadcast %cst_5 : f32 to vector<8x1xf32>
    %8 = arith.divf %6, %7 : vector<8x1xf32>
    %9 = vector.broadcast %8 : vector<8x1xf32> to vector<8x32xf32>
    %10 = arith.subf %4, %9 : vector<8x32xf32>
    %11 = arith.mulf %10, %10 : vector<8x32xf32>
    %cst_6 = arith.constant dense<0.000000e+00> : vector<8xf32>
    %12 = vector.multi_reduction <add>, %11, %cst_6 [1] : vector<8x32xf32> to vector<8xf32>
    %13 = vector.shape_cast %12 : vector<8xf32> to vector<8x1xf32>
    %cst_7 = arith.constant 3.200000e+01 : f32
    %14 = vector.broadcast %cst_7 : f32 to vector<8x1xf32>
    %15 = arith.divf %13, %14 : vector<8x1xf32>
    %16 = vector.broadcast %8 : vector<8x1xf32> to vector<8x32xf32>
    %17 = arith.subf %4, %16 : vector<8x32xf32>
    %cst_8 = arith.constant 9.99999997E-7 : f32
    %18 = vector.broadcast %cst_8 : f32 to vector<8x1xf32>
    %19 = arith.addf %15, %18 : vector<8x1xf32>
    %20 = math.rsqrt %19 : vector<8x1xf32>
    %21 = vector.broadcast %20 : vector<8x1xf32> to vector<8x32xf32>
    %22 = arith.mulf %17, %21 : vector<8x32xf32>
    %c0_9 = arith.constant 0 : index
    %c0_10 = arith.constant 0 : index
    %23 = vector.load %arg3[%c0_9, %c0_10] : memref<1x32xf32, #tpu.memory_space<vmem>>, vector<1x32xf32>
    %24 = vector.broadcast %23 : vector<1x32xf32> to vector<8x32xf32>
    %25 = arith.mulf %22, %24 : vector<8x32xf32>
    %c0_11 = arith.constant 0 : index
    %c0_12 = arith.constant 0 : index
    %26 = vector.load %arg4[%c0_11, %c0_12] : memref<1x32xf32, #tpu.memory_space<vmem>>, vector<1x32xf32>
    %27 = vector.broadcast %26 : vector<1x32xf32> to vector<8x32xf32>
    %28 = arith.addf %25, %27 : vector<8x32xf32>
    %29 = arith.truncf %28 : vector<8x32xf32> to vector<8x32xbf16>
    %c0_13 = arith.constant 0 : index
    %c0_14 = arith.constant 0 : index
    %30 = vector.load %arg5[%c0_13, %c0_14] : memref<32x96xbf16, #tpu.memory_space<vmem>>, vector<32x96xbf16>
    %cst_15 = arith.constant dense<0.000000e+00> : vector<8x96xf32>
    %31 = tpu.matmul %29, %30, %cst_15 {dimension_numbers = #tpu.dot_dimension_numbers<[1], [0], [0], [1], [0, 0, 1, 1], [], []>} : vector<8x32xbf16>, vector<32x96xbf16>, vector<8x96xf32> -> vector<8x96xf32>
    %c0_16 = arith.constant 0 : index
    %c0_17 = arith.constant 0 : index
    %32 = vector.load %arg6[%c0_16, %c0_17] : memref<1x96xf32, #tpu.memory_space<vmem>>, vector<1x96xf32>
    %33 = vector.broadcast %32 : vector<1x96xf32> to vector<8x96xf32>
    %34 = arith.addf %31, %33 : vector<8x96xf32>
    %35 = arith.truncf %34 : vector<8x96xf32> to vector<8x96xbf16>
    %36 = vector.extract_strided_slice %35 {offsets = [0, 0], sizes = [8, 32], strides = [1, 1]} : vector<8x96xbf16> to vector<8x32xbf16>
    %37 = vector.shape_cast %36 : vector<8x32xbf16> to vector<8x4x8xbf16>
    %38 = tpu.transpose %37, [1, 0, 2] : vector<8x4x8xbf16> -> vector<4x8x8xbf16>
    %39 = vector.extract_strided_slice %35 {offsets = [0, 32], sizes = [8, 32], strides = [1, 1]} : vector<8x96xbf16> to vector<8x32xbf16>
    %40 = vector.shape_cast %39 : vector<8x32xbf16> to vector<8x4x8xbf16>
    %41 = tpu.transpose %40, [1, 0, 2] : vector<8x4x8xbf16> -> vector<4x8x8xbf16>
    %42 = vector.extract_strided_slice %35 {offsets = [0, 64], sizes = [8, 32], strides = [1, 1]} : vector<8x96xbf16> to vector<8x32xbf16>
    %43 = vector.shape_cast %42 : vector<8x32xbf16> to vector<8x4x8xbf16>
    %44 = tpu.transpose %43, [1, 0, 2] : vector<8x4x8xbf16> -> vector<4x8x8xbf16>
    %cst_18 = arith.constant dense<0.000000e+00> : vector<4x8x8xf32>
    %45 = tpu.matmul %38, %41, %cst_18 {dimension_numbers = #tpu.dot_dimension_numbers<[2], [2], [1], [1], [0, 0, 0, 1, 1, 1], [0], [0]>} : vector<4x8x8xbf16>, vector<4x8x8xbf16>, vector<4x8x8xf32> -> vector<4x8x8xf32>
    %cst_19 = arith.constant dense<0xFF800000> : vector<4x8xf32>
    %46 = vector.multi_reduction <maximumf>, %45, %cst_19 [2] : vector<4x8x8xf32> to vector<4x8xf32>
    %47 = vector.shape_cast %46 : vector<4x8xf32> to vector<4x8x1xf32>
    %48 = vector.broadcast %47 : vector<4x8x1xf32> to vector<4x8x8xf32>
    %49 = arith.subf %45, %48 : vector<4x8x8xf32>
    %50 = math.exp %49 : vector<4x8x8xf32>
    %cst_20 = arith.constant dense<0.000000e+00> : vector<4x8xf32>
    %51 = vector.multi_reduction <add>, %50, %cst_20 [2] : vector<4x8x8xf32> to vector<4x8xf32>
    %52 = vector.shape_cast %51 : vector<4x8xf32> to vector<4x8x1xf32>
    %53 = tpu.reciprocal %52 {approx = true} : vector<4x8x1xf32> -> vector<4x8x1xf32>
    %54 = vector.broadcast %53 : vector<4x8x1xf32> to vector<4x8x8xf32>
    %55 = arith.mulf %50, %54 : vector<4x8x8xf32>
    %56 = arith.truncf %55 : vector<4x8x8xf32> to vector<4x8x8xbf16>
    %cst_21 = arith.constant dense<0.000000e+00> : vector<4x8x8xf32>
    %57 = tpu.matmul %56, %44, %cst_21 {dimension_numbers = #tpu.dot_dimension_numbers<[2], [1], [1], [2], [0, 0, 0, 1, 1, 2], [0], [0]>} : vector<4x8x8xbf16>, vector<4x8x8xbf16>, vector<4x8x8xf32> -> vector<4x8x8xf32>
    %58 = arith.truncf %57 : vector<4x8x8xf32> to vector<4x8x8xbf16>
    %59 = tpu.transpose %58, [1, 0, 2] : vector<4x8x8xbf16> -> vector<8x4x8xbf16>
    %60 = vector.shape_cast %59 : vector<8x4x8xbf16> to vector<8x32xbf16>
    %c0_22 = arith.constant 0 : index
    %c0_23 = arith.constant 0 : index
    %61 = vector.load %arg7[%c0_22, %c0_23] : memref<32x32xbf16, #tpu.memory_space<vmem>>, vector<32x32xbf16>
    %cst_24 = arith.constant dense<0.000000e+00> : vector<8x32xf32>
    %62 = tpu.matmul %60, %61, %cst_24 {dimension_numbers = #tpu.dot_dimension_numbers<[1], [0], [0], [1], [0, 0, 1, 1], [], []>} : vector<8x32xbf16>, vector<32x32xbf16>, vector<8x32xf32> -> vector<8x32xf32>
    %c0_25 = arith.constant 0 : index
    %c0_26 = arith.constant 0 : index
    %63 = vector.load %arg8[%c0_25, %c0_26] : memref<1x32xf32, #tpu.memory_space<vmem>>, vector<1x32xf32>
    %64 = vector.broadcast %63 : vector<1x32xf32> to vector<8x32xf32>
    %65 = arith.addf %62, %64 : vector<8x32xf32>
    %66 = arith.addf %65, %4 : vector<8x32xf32>
    %c0_27 = arith.constant 0 : index
    %c0_28 = arith.constant 0 : index
    %c0_29 = arith.constant 0 : index
    %67 = vector.load %arg9[%c0_27, %c0_28, %c0_29] : memref<1x8x32xf32, #tpu.memory_space<vmem>>, vector<1x8x32xf32>
    %68 = vector.shape_cast %67 : vector<1x8x32xf32> to vector<8x32xf32>
    %69 = vector.shape_cast %66 : vector<8x32xf32> to vector<1x8x32xf32>
    tpu.vector_store %arg9[%c0_27, %c0_28, %c0_29], %69 {strides = array<i32>} : memref<1x8x32xf32, #tpu.memory_space<vmem>>, vector<1x8x32xf32>,
    return
  }
  func.func @transform_0(%arg0: i32) -> (i32, i32, i32) {
    %c0_i32 = arith.constant 0 : i32
    %c0_i32_0 = arith.constant 0 : i32
    %c0_i32_1 = arith.constant 0 : i32
    return %arg0, %c0_i32, %c0_i32_0 : i32, i32, i32
  }
  func.func @transform_1(%arg0: i32) -> (i32, i32, i32) {
    %c0_i32 = arith.constant 0 : i32
    %c0_i32_0 = arith.constant 0 : i32
    %c0_i32_1 = arith.constant 0 : i32
    %c0_i32_2 = arith.constant 0 : i32
    return %c0_i32, %c0_i32_0, %c0_i32_1 : i32, i32, i32
  }
  func.func @transform_2(%arg0: i32) -> (i32, i32) {
    %c0_i32 = arith.constant 0 : i32
    %c0_i32_0 = arith.constant 0 : i32
    %c0_i32_1 = arith.constant 0 : i32
    return %c0_i32, %c0_i32_0 : i32, i32
  }
  func.func @transform_3(%arg0: i32) -> (i32, i32) {
    %c0_i32 = arith.constant 0 : i32
    %c0_i32_0 = arith.constant 0 : i32
    %c0_i32_1 = arith.constant 0 : i32
    return %c0_i32, %c0_i32_0 : i32, i32
  }
  func.func @transform_4(%arg0: i32) -> (i32, i32) {
    %c0_i32 = arith.constant 0 : i32
    %c0_i32_0 = arith.constant 0 : i32
    %c0_i32_1 = arith.constant 0 : i32
    return %c0_i32, %c0_i32_0 : i32, i32
  }
  func.func @transform_5(%arg0: i32) -> (i32, i32) {
    %c0_i32 = arith.constant 0 : i32
    %c0_i32_0 = arith.constant 0 : i32
    %c0_i32_1 = arith.constant 0 : i32
    return %c0_i32, %c0_i32_0 : i32, i32
  }
  func.func @transform_6(%arg0: i32) -> (i32, i32) {
    %c0_i32 = arith.constant 0 : i32
    %c0_i32_0 = arith.constant 0 : i32
    %c0_i32_1 = arith.constant 0 : i32
    return %c0_i32, %c0_i32_0 : i32, i32
  }
  func.func @transform_7(%arg0: i32) -> (i32, i32) {
    %c0_i32 = arith.constant 0 : i32
    %c0_i32_0 = arith.constant 0 : i32
    %c0_i32_1 = arith.constant 0 : i32
    return %c0_i32, %c0_i32_0 : i32, i32
  }
  func.func @transform_8(%arg0: i32) -> (i32, i32, i32) {
    %c0_i32 = arith.constant 0 : i32
    %c0_i32_0 = arith.constant 0 : i32
    %c0_i32_1 = arith.constant 0 : i32
    return %arg0, %c0_i32, %c0_i32_0 : i32, i32, i32
  }
}

</mosaic_0001>

<llo_original>
// kernel: tpu_custom_call.1
$region0: #{tpu_custom_call.1}
  #allocation0 [shape = 'u32[]', space=smem, size = 0x4, offset = 0x4, fixed_abs, tag = 'smem constant byte address 0x4 - core index']
  #allocation1 [shape = 'u32[144,128]{1,0:T(1,128)}', space=vmem, size = 0x12000, scoped, tag = 'internal scratch']
  %s0 = inlined_call_operand.hbm [shape: f32[2,8,32], index: 0, kind: input, shape index: {}]
  %s1 = inlined_call_operand.hbm [shape: f32[1,8,32], index: 1, kind: input, shape index: {}]
  %s2 = inlined_call_operand.vmem [shape: f32[1,32], index: 2, kind: input, shape index: {}]
  %s3 = inlined_call_operand.vmem [shape: f32[1,32], index: 3, kind: input, shape index: {}]
  %s4 = inlined_call_operand.hbm [shape: bf16[32,96], index: 4, kind: input, shape index: {}]
  %s5 = inlined_call_operand.vmem [shape: f32[1,96], index: 5, kind: input, shape index: {}]
  %s6 = inlined_call_operand.vmem [shape: bf16[32,32], index: 6, kind: input, shape index: {}]
  %s7 = inlined_call_operand.vmem [shape: f32[1,32], index: 7, kind: input, shape index: {}]
  %s8 = inlined_call_operand.hbm [shape: f32[2,8,32], index: 8, kind: output, shape index: {}]
  %s9 = sld [smem:[#allocation0]]
  $region77: #{tpu_custom_call.1} parent=0
    _
  %s11 = ssub.s32 1, %s9
  %s12 = scalar_select 0, %s11, %s9
  $region1: #{tpu_custom_call.1} parent=0
    #allocation2 [shape = 'u8[8192]{0}', space=vmem, size = 0x2000, scoped, tag = 'input window, operand 0']
    #allocation3 [shape = 's32[2]{0}', space=sflag, size = 0x8, scoped, tag = 'scoped memory for tpu_custom_call.1']
    #allocation4 [shape = 's32[2]{0}', space=sflag, size = 0x8, scoped, tag = 'scoped memory for tpu_custom_call.1']
    #allocation5 [shape = 'u8[4096]{0}', space=vmem, size = 0x1000, scoped, tag = 'input window, operand 1, single buffered']
    #allocation6 [shape = 's32[1]{0}', space=sflag, size = 0x4, scoped, tag = 'scoped memory for tpu_custom_call.1']
    #allocation7 [shape = 'u8[8192]{0}', space=vmem, size = 0x2000, scoped, tag = 'input window, operand 4, single buffered']
    #allocation8 [shape = 'u8[8192]{0}', space=vmem, size = 0x2000, scoped, tag = 'output window, operand 0']
    %13 = vsyncpa [#allocation3], 0
    %s14 = scalar_lea.sflag [#allocation3], 1
    %15 = vsyncpa %s14, 0
    %16 = vsyncpa [#allocation6], 0
    %17 = vsyncpa [#allocation4], 0
    %s18 = scalar_lea.sflag [#allocation4], 1
    %19 = vsyncpa %s18, 0
    loop: start=0, step=1, limit=4
    $region2: #{tpu_custom_call.1} parent=1 // loop_pre_header
      _
    $region3: #{tpu_custom_call.1} parent=1 // loop_header
      %s21 = sphi 0, %s25
      %p22 = scmp.ge.s32.totalorder %s21, 4
      %s31 = sphi 0, %s33
      %s34 = sphi 0, %s31
      %s35 = sphi 0, %s34
      %s51 = sphi 0, %s35
      %s55 = sphi 0, %s55
      %s57 = sphi 0, %s55
      %s58 = sphi 0, %s57
      %s72 = sphi 0, %s58
      %s76 = sphi 0, %s76
      %s78 = sphi 0, %s76
      %s79 = sphi 0, %s78
      %s93 = sphi 0, %s79
      %s97 = sphi 0, %s97
      %s99 = sphi 0, %s97
      %s100 = sphi 0, %s99
      %s114 = sphi 0, %s100
      %s118 = sphi 0, %s118
      %s120 = sphi 0, %s118
      %s121 = sphi 0, %s120
      %s135 = sphi 0, %s121
      %s139 = sphi 0, %s139
      %s141 = sphi 0, %s139
      %s142 = sphi 0, %s141
      %s156 = sphi 0, %s142
      %s160 = sphi 0, %s160
      %s162 = sphi 0, %s160
      %s163 = sphi 0, %s162
      %s177 = sphi 0, %s163
      %s181 = sphi 0, %s181
      %s183 = sphi 0, %s181
      %s184 = sphi 0, %s183
      %s198 = sphi 0, %s184
      %s204 = sphi 0, %s206
      %s207 = sphi 0, %s204
      %s208 = sphi 0, %s207
      %s224 = sphi 0, %s208
    $region4: #{tpu_custom_call.1} parent=1 // loop_header_branch
      %24 = sbr.rel (%p22) target = $region8
    $region5: #{tpu_custom_call.1} parent=1 // loop_body
      %s26 = ssub.s32 %s21, 1
      %s27 = ssub.s32 %s21, 2
      %s28 = sadd.s32 %s21, 1
      %s29 = ssub.s32 %s21, %s28
      %p30 = scmp.eq.s32.totalorder %s29, 0
      %s32 = sadd.s32 %s31, 1
      %s33 = scalar_select %p30, %s31, %s32
      %p36 = pneg %p30
      %p37 = scmp.eq.s32.totalorder %s21, 1
      %p38 = por %p36, %p37
      %p39 = scmp.ne.s32.totalorder %s31, %s34
      %p40 = scmp.eq.s32.totalorder %s21, 0
      %p41 = por %p39, %p40
      %p42 = scmp.ne.s32.totalorder %s31, %s34
      %p43 = scmp.eq.s32.totalorder %s26, 1
      %p44 = por %p42, %p43
      %p45 = scmp.ne.s32.totalorder %s34, %s35
      %p46 = scmp.eq.s32.totalorder %s26, 0
      %p47 = por %p45, %p46
      %p48 = scmp.ne.s32.totalorder %s34, %s35
      %p49 = scmp.eq.s32.totalorder %s27, 1
      %p50 = por %p48, %p49
      %p52 = scmp.ne.s32.totalorder %s35, %s51
      %p53 = scmp.eq.s32.totalorder %s27, 0
      %p54 = por %p52, %p53
      %s56 = sadd.s32 %s55, 1
      %p59 = scmp.eq.s32.totalorder %s21, 1
      %p60 = scmp.ne.s32.totalorder %s55, %s57
      %p61 = scmp.eq.s32.totalorder %s21, 0
      %p62 = por %p60, %p61
      %p63 = scmp.ne.s32.totalorder %s55, %s57
      %p64 = scmp.eq.s32.totalorder %s26, 1
      %p65 = por %p63, %p64
      %p66 = scmp.ne.s32.totalorder %s57, %s58
      %p67 = scmp.eq.s32.totalorder %s26, 0
      %p68 = por %p66, %p67
      %p69 = scmp.ne.s32.totalorder %s57, %s58
      %p70 = scmp.eq.s32.totalorder %s27, 1
      %p71 = por %p69, %p70
      %p73 = scmp.ne.s32.totalorder %s58, %s72
      %p74 = scmp.eq.s32.totalorder %s27, 0
      %p75 = por %p73, %p74
      %s77 = sadd.s32 %s76, 1
      %p80 = scmp.eq.s32.totalorder %s21, 1
      %p81 = scmp.ne.s32.totalorder %s76, %s78
      %p82 = scmp.eq.s32.totalorder %s21, 0
      %p83 = por %p81, %p82
      %p84 = scmp.ne.s32.totalorder %s76, %s78
      %p85 = scmp.eq.s32.totalorder %s26, 1
      %p86 = por %p84, %p85
      %p87 = scmp.ne.s32.totalorder %s78, %s79
      %p88 = scmp.eq.s32.totalorder %s26, 0
      %p89 = por %p87, %p88
      %p90 = scmp.ne.s32.totalorder %s78, %s79
      %p91 = scmp.eq.s32.totalorder %s27, 1
      %p92 = por %p90, %p91
      %p94 = scmp.ne.s32.totalorder %s79, %s93
      %p95 = scmp.eq.s32.totalorder %s27, 0
      %p96 = por %p94, %p95
      %s98 = sadd.s32 %s97, 1
      %p101 = scmp.eq.s32.totalorder %s21, 1
      %p102 = scmp.ne.s32.totalorder %s97, %s99
      %p103 = scmp.eq.s32.totalorder %s21, 0
      %p104 = por %p102, %p103
      %p105 = scmp.ne.s32.totalorder %s97, %s99
      %p106 = scmp.eq.s32.totalorder %s26, 1
      %p107 = por %p105, %p106
      %p108 = scmp.ne.s32.totalorder %s99, %s100
      %p109 = scmp.eq.s32.totalorder %s26, 0
      %p110 = por %p108, %p109
      %p111 = scmp.ne.s32.totalorder %s99, %s100
      %p112 = scmp.eq.s32.totalorder %s27, 1
      %p113 = por %p111, %p112
      %p115 = scmp.ne.s32.totalorder %s100, %s114
      %p116 = scmp.eq.s32.totalorder %s27, 0
      %p117 = por %p115, %p116
      %s119 = sadd.s32 %s118, 1
      %p122 = scmp.eq.s32.totalorder %s21, 1
      %p123 = scmp.ne.s32.totalorder %s118, %s120
      %p124 = scmp.eq.s32.totalorder %s21, 0
      %p125 = por %p123, %p124
      %p126 = scmp.ne.s32.totalorder %s118, %s120
      %p127 = scmp.eq.s32.totalorder %s26, 1
      %p128 = por %p126, %p127
      %p129 = scmp.ne.s32.totalorder %s120, %s121
      %p130 = scmp.eq.s32.totalorder %s26, 0
      %p131 = por %p129, %p130
      %p132 = scmp.ne.s32.totalorder %s120, %s121
      %p133 = scmp.eq.s32.totalorder %s27, 1
      %p134 = por %p132, %p133
      %p136 = scmp.ne.s32.totalorder %s121, %s135
      %p137 = scmp.eq.s32.totalorder %s27, 0
      %p138 = por %p136, %p137
      %s140 = sadd.s32 %s139, 1
      %p143 = scmp.eq.s32.totalorder %s21, 1
      %p144 = scmp.ne.s32.totalorder %s139, %s141
      %p145 = scmp.eq.s32.totalorder %s21, 0
      %p146 = por %p144, %p145
      %p147 = scmp.ne.s32.totalorder %s139, %s141
      %p148 = scmp.eq.s32.totalorder %s26, 1
      %p149 = por %p147, %p148
      %p150 = scmp.ne.s32.totalorder %s141, %s142
      %p151 = scmp.eq.s32.totalorder %s26, 0
      %p152 = por %p150, %p151
      %p153 = scmp.ne.s32.totalorder %s141, %s142
      %p154 = scmp.eq.s32.totalorder %s27, 1
      %p155 = por %p153, %p154
      %p157 = scmp.ne.s32.totalorder %s142, %s156
      %p158 = scmp.eq.s32.totalorder %s27, 0
      %p159 = por %p157, %p158
      %s161 = sadd.s32 %s160, 1
      %p164 = scmp.eq.s32.totalorder %s21, 1
      %p165 = scmp.ne.s32.totalorder %s160, %s162
      %p166 = scmp.eq.s32.totalorder %s21, 0
      %p167 = por %p165, %p166
      %p168 = scmp.ne.s32.totalorder %s160, %s162
      %p169 = scmp.eq.s32.totalorder %s26, 1
      %p170 = por %p168, %p169
      %p171 = scmp.ne.s32.totalorder %s162, %s163
      %p172 = scmp.eq.s32.totalorder %s26, 0
      %p173 = por %p171, %p172
      %p174 = scmp.ne.s32.totalorder %s162, %s163
      %p175 = scmp.eq.s32.totalorder %s27, 1
      %p176 = por %p174, %p175
      %p178 = scmp.ne.s32.totalorder %s163, %s177
      %p179 = scmp.eq.s32.totalorder %s27, 0
      %p180 = por %p178, %p179
      %s182 = sadd.s32 %s181, 1
      %p185 = scmp.eq.s32.totalorder %s21, 1
      %p186 = scmp.ne.s32.totalorder %s181, %s183
      %p187 = scmp.eq.s32.totalorder %s21, 0
      %p188 = por %p186, %p187
      %p189 = scmp.ne.s32.totalorder %s181, %s183
      %p190 = scmp.eq.s32.totalorder %s26, 1
      %p191 = por %p189, %p190
      %p192 = scmp.ne.s32.totalorder %s183, %s184
      %p193 = scmp.eq.s32.totalorder %s26, 0
      %p194 = por %p192, %p193
      %p195 = scmp.ne.s32.totalorder %s183, %s184
      %p196 = scmp.eq.s32.totalorder %s27, 1
      %p197 = por %p195, %p196
      %p199 = scmp.ne.s32.totalorder %s184, %s198
      %p200 = scmp.eq.s32.totalorder %s27, 0
      %p201 = por %p199, %p200
      %s202 = ssub.s32 %s21, %s28
      %p203 = scmp.eq.s32.totalorder %s202, 0
      %s205 = sadd.s32 %s204, 1
      %s206 = scalar_select %p203, %s204, %s205
      %p209 = pneg %p203
      %p210 = scmp.eq.s32.totalorder %s21, 1
      %p211 = por %p209, %p210
      %p212 = scmp.ne.s32.totalorder %s204, %s207
      %p213 = scmp.eq.s32.totalorder %s21, 0
      %p214 = por %p212, %p213
      %p215 = scmp.ne.s32.totalorder %s204, %s207
      %p216 = scmp.eq.s32.totalorder %s26, 1
      %p217 = por %p215, %p216
      %p218 = scmp.ne.s32.totalorder %s207, %s208
      %p219 = scmp.eq.s32.totalorder %s26, 0
      %p220 = por %p218, %p219
      %p221 = scmp.ne.s32.totalorder %s207, %s208
      %p222 = scmp.eq.s32.totalorder %s27, 1
      %p223 = por %p221, %p222
      %p225 = scmp.ne.s32.totalorder %s208, %s224
      %p226 = scmp.eq.s32.totalorder %s27, 0
      %p227 = por %p225, %p226
      %p228 = scmp.le.s32.totalorder 1, %s21
      %p229 = scmp.lt.s32.totalorder %s21, 3
      %p230 = pnand %p228, %p229
      %p231 = pneg %p230
      // Predicated region
      $region9: #{tpu_custom_call.1} parent=5 // pred_check
        _
      $region10: #{tpu_custom_call.1} parent=5 // pred_check_branch
        %233 = sbr.rel (%p230) target = $region12
      $region11: #{tpu_custom_call.1} parent=5 // pred_region
        %s234 = ssub.s32 %s21, 1
        // Predicated region
        $region13: #{tpu_custom_call.1} parent=11 // pred_check
          %p235 = pneg %p68
        $region14: #{tpu_custom_call.1} parent=11 // pred_check_branch
          %237 = sbr.rel (%p235) target = $region16
        $region15: #{tpu_custom_call.1} parent=11 // pred_region
          %s239 = ssub.s32 128, 128
          %240 = vsyncadd [#allocation6], %s239
          %s242 = sshll.u32 [#allocation5], 4
          %s243 = int_to_ptr.vmem [resolvable:$true] %s242
          %245 = dma.hbm_to_vmem [thread:$0]  %s1, 128, %s243, [#allocation6]
        $region16: #{tpu_custom_call.1} parent=11 // pred_fallthru
          _
        // Predicated region
        $region17: #{tpu_custom_call.1} parent=11 // pred_check
          %p246 = pneg %p89
        $region18: #{tpu_custom_call.1} parent=11 // pred_check_branch
          %248 = sbr.rel (%p246) target = $region20
        $region19: #{tpu_custom_call.1} parent=11 // pred_region
          _
        $region20: #{tpu_custom_call.1} parent=11 // pred_fallthru
          _
        // Predicated region
        $region21: #{tpu_custom_call.1} parent=11 // pred_check
          %p249 = pneg %p110
        $region22: #{tpu_custom_call.1} parent=11 // pred_check_branch
          %251 = sbr.rel (%p249) target = $region24
        $region23: #{tpu_custom_call.1} parent=11 // pred_region
          _
        $region24: #{tpu_custom_call.1} parent=11 // pred_fallthru
          _
        // Predicated region
        $region25: #{tpu_custom_call.1} parent=11 // pred_check
          %p252 = pneg %p131
        $region26: #{tpu_custom_call.1} parent=11 // pred_check_branch
          %254 = sbr.rel (%p252) target = $region28
        $region27: #{tpu_custom_call.1} parent=11 // pred_region
          %s256 = ssub.s32 256, 256
          %257 = vsyncadd [#allocation6], %s256
          %s258 = sshll.u32 [#allocation7], 4
          %s259 = int_to_ptr.vmem [resolvable:$true] %s258
          %264 = dma.hbm_to_vmem [thread:$0]  %s4, 256, %s259, [#allocation6], 64, 64, 4
        $region28: #{tpu_custom_call.1} parent=11 // pred_fallthru
          _
        // Predicated region
        $region29: #{tpu_custom_call.1} parent=11 // pred_check
          %p265 = pneg %p152
        $region30: #{tpu_custom_call.1} parent=11 // pred_check_branch
          %267 = sbr.rel (%p265) target = $region32
        $region31: #{tpu_custom_call.1} parent=11 // pred_region
          _
        $region32: #{tpu_custom_call.1} parent=11 // pred_fallthru
          _
        // Predicated region
        $region33: #{tpu_custom_call.1} parent=11 // pred_check
          %p268 = pneg %p173
        $region34: #{tpu_custom_call.1} parent=11 // pred_check_branch
          %270 = sbr.rel (%p268) target = $region36
        $region35: #{tpu_custom_call.1} parent=11 // pred_region
          _
        $region36: #{tpu_custom_call.1} parent=11 // pred_fallthru
          _
        // Predicated region
        $region37: #{tpu_custom_call.1} parent=11 // pred_check
          %p271 = pneg %p194
        $region38: #{tpu_custom_call.1} parent=11 // pred_check_branch
          %273 = sbr.rel (%p271) target = $region40
        $region39: #{tpu_custom_call.1} parent=11 // pred_region
          _
        $region40: #{tpu_custom_call.1} parent=11 // pred_fallthru
          _
      $region12: #{tpu_custom_call.1} parent=5 // pred_fallthru
        _
      %p274 = scmp.lt.s32.totalorder %s21, 2
      // Predicated region
      $region41: #{tpu_custom_call.1} parent=5 // pred_check
        %p275 = pneg %p274
      $region42: #{tpu_custom_call.1} parent=5 // pred_check_branch
        %277 = sbr.rel (%p275) target = $region44
      $region43: #{tpu_custom_call.1} parent=5 // pred_region
        // Predicated region
        $region45: #{tpu_custom_call.1} parent=43 // pred_check
          %p278 = pneg %p41
        $region46: #{tpu_custom_call.1} parent=43 // pred_check_branch
          %280 = sbr.rel (%p278) target = $region48
        $region47: #{tpu_custom_call.1} parent=43 // pred_region
          %s281 = sand.u32 %s31, 1
          %s282 = scalar_lea.sflag [#allocation3], %s281
          %s283 = sand.u32 %s31, 1
          %s284 = smul.addr %s283, 8
          %s285 = scalar_lea.vmem [#allocation2], %s284
          %s287 = ssub.s32 128, 128
          %288 = vsyncadd %s282, %s287
          %s289 = smul.addr %s21, 128
          %s290 = scalar_lea.hbm %s0, %s289
          %s292 = sshll.u32 %s285, 4
          %s293 = int_to_ptr.vmem [resolvable:$true] %s292
          %295 = dma.hbm_to_vmem [thread:$0]  %s290, 128, %s293, %s282
        $region48: #{tpu_custom_call.1} parent=43 // pred_fallthru
          _
      $region44: #{tpu_custom_call.1} parent=5 // pred_fallthru
        _
      %p296 = scmp.le.s32.totalorder 1, %s21
      %p297 = scmp.lt.s32.totalorder %s21, 3
      %p298 = pnand %p296, %p297
      %p299 = pneg %p298
      // Predicated region
      $region49: #{tpu_custom_call.1} parent=5 // pred_check
        _
      $region50: #{tpu_custom_call.1} parent=5 // pred_check_branch
        %301 = sbr.rel (%p298) target = $region52
      $region51: #{tpu_custom_call.1} parent=5 // pred_region
        %s302 = ssub.s32 %s21, 1
        %s303 = sand.u32 %s34, 1
        %s304 = scalar_lea.sflag [#allocation3], %s303
        %s305 = sand.u32 %s34, 1
        %s306 = smul.addr %s305, 8
        %s307 = scalar_lea.vmem [#allocation2], %s306
        // Predicated region
        $region53: #{tpu_custom_call.1} parent=51 // pred_check
          %p308 = pneg %p47
        $region54: #{tpu_custom_call.1} parent=51 // pred_check_branch
          %310 = sbr.rel (%p308) target = $region56
        $region55: #{tpu_custom_call.1} parent=51 // pred_region
          %311 = dma.done %s304, 128
        $region56: #{tpu_custom_call.1} parent=51 // pred_fallthru
          _
        // Predicated region
        $region57: #{tpu_custom_call.1} parent=51 // pred_check
          %p312 = pneg %p68
        $region58: #{tpu_custom_call.1} parent=51 // pred_check_branch
          %314 = sbr.rel (%p312) target = $region60
        $region59: #{tpu_custom_call.1} parent=51 // pred_region
          %315 = dma.done [#allocation6], 128
        $region60: #{tpu_custom_call.1} parent=51 // pred_fallthru
          _
        // Predicated region
        $region61: #{tpu_custom_call.1} parent=51 // pred_check
          %p316 = pneg %p131
        $region62: #{tpu_custom_call.1} parent=51 // pred_check_branch
          %318 = sbr.rel (%p316) target = $region64
        $region63: #{tpu_custom_call.1} parent=51 // pred_region
          %319 = dma.done [#allocation6], 256
        $region64: #{tpu_custom_call.1} parent=51 // pred_fallthru
          _
        %s320 = sand.u32 %s34, 1
        %s321 = scalar_lea.sflag [#allocation3], %s320
        %s322 = sand.u32 %s34, 1
        %s323 = smul.addr %s322, 8
        %s324 = scalar_lea.vmem [#allocation2], %s323
        %p325 = pneg %p47
        %p326 = pneg %p44
        %p327 = pneg %p68
        %p328 = pneg %p65
        %p329 = pneg %p89
        %p330 = pneg %p86
        %p331 = pneg %p110
        %p332 = pneg %p107
        %p333 = pneg %p131
        %p334 = pneg %p128
        %p335 = pneg %p152
        %p336 = pneg %p149
        %p337 = pneg %p173
        %p338 = pneg %p170
        %p339 = pneg %p194
        %p340 = pneg %p191
        %p341 = pneg %p220
        %p342 = pneg %p217
        %s343 = sand.u32 %s207, 1
        %s344 = scalar_lea.sflag [#allocation4], %s343
        %s345 = sand.u32 %s207, 1
        %s346 = smul.addr %s345, 8
        %s347 = scalar_lea.vmem [#allocation8], %s346
        %v349 = vld [vmem:[%s307] sm:$0xff]
        %v350 = vld [vmem:[#allocation5] sm:$0xff]
        %v351 = vadd.f32 %v349, %v350
        %vm352 = vcmask 261120
        %v353 = vsel %vm352, %v351, 0.0
        %354 = vadd.xlane.f32.xlu0 %v353
        %v355 = vpop.xlane.xlu0 %354
        %v356 = vrcp.pop 32.0
        %v357 = vmul.f32 %v355, %v356
        %v358 = vsub.f32 %v351, %v357
        %v359 = vmul.f32 %v358, %v358
        %v360 = vsel %vm352, %v359, 0.0
        %361 = vadd.xlane.f32.xlu0 %v360
        %v362 = vpop.xlane.xlu0 %361
        %v363 = vmul.f32 %v362, %v356
        %v364 = vadd.f32 %v363, 1e-06
        %v365 = vrsqrt.pop %v364
        %v366 = vmul.f32 %v358, %v365
        %v367 = vld [vmem:[%s2] sm:$0x1]
        %v369 = vlaneseq
        %v370 = vshrl.u32 %v369, 7
        %v371 = vsub.s32 0, %v370
        %v372 = vrot.slane %v367, %v371
        %v374 = vmul.f32 %v366, %v372
        %v375 = vld [vmem:[%s3] sm:$0x1]
        %v377 = vlaneseq
        %v378 = vshrl.u32 %v377, 7
        %v379 = vsub.s32 0, %v378
        %v380 = vrot.slane %v375, %v379
        %v382 = vadd.f32 %v374, %v380
        %v383 = vpack.c.bf16 %v382, %v382
        %v384 = vld [vmem:[#allocation7] sm:$0xf]
        %v385 = vld [vmem:[#allocation7 + $0x4] sm:$0xf]
        %v386 = vld [vmem:[#allocation7 + $0x8] sm:$0xf]
        %v387 = vld [vmem:[#allocation7 + $0xc] sm:$0xf]
        %v388 = vld [vmem:[%s5] sm:$0x1]
        %v390 = vlaneseq
        %v391 = vshrl.u32 %v390, 7
        %v392 = vsub.s32 0, %v391
        %v393 = vrot.slane %v388, %v392
        %v399 = vunpack.c.l.b16 %v384
        %v400 = vunpack.c.l.b16 %v385
        %v401 = vunpack.c.l.b16 %v386
        %v402 = vunpack.c.l.b16 %v387
        %v403 = vpack.c.b16 %v400, %v399
        %v404 = vpack.c.b16 %v402, %v401
        %v408 = vsel %vm352, %v383, 0
        %410 = vmatprep.subr.bf16.mxu0 0
        %411 = vmatpush1.bf16.msra.mxu0 %v403
        %412 = vmatprep.subr.bf16.mxu0 0
        %413 = vmatpush1.bf16.msra.mxu0 %v404
        %414 = vmatprep.subr.bf16.mxu0 0
        %415 = vmatpush1.bf16.msra.mxu0 0
        %416 = vmatprep.subr.bf16.mxu0 0
        %417 = vmatpush1.bf16.msra.mxu0 0
        %418 = vmatprep.subr.bf16.mxu0 0
        %419 = vmatpush1.bf16.msra.mxu0 0
        %420 = vmatprep.subr.bf16.mxu0 0
        %421 = vmatpush1.bf16.msra.mxu0 0
        %422 = vmatprep.subr.bf16.mxu0 0
        %423 = vmatpush1.bf16.msra.mxu0 0
        %424 = vmatprep.subr.bf16.mxu0 0
        %425 = vmatpush1.bf16.msra.mxu0 0
        %426 = vmatprep.subr.bf16.mxu0 0
        %427 = vmatpush1.bf16.msra.mxu0 0
        %428 = vmatprep.subr.bf16.mxu0 0
        %429 = vmatpush1.bf16.msra.mxu0 0
        %430 = vmatprep.subr.bf16.mxu0 0
        %431 = vmatpush1.bf16.msra.mxu0 0
        %432 = vmatprep.subr.bf16.mxu0 0
        %433 = vmatpush1.bf16.msra.mxu0 0
        %434 = vmatprep.subr.bf16.mxu0 0
        %435 = vmatpush1.bf16.msra.mxu0 0
        %436 = vmatprep.subr.bf16.mxu0 0
        %437 = vmatpush1.bf16.msra.mxu0 0
        %438 = vmatprep.subr.bf16.mxu0 0
        %439 = vmatpush1.bf16.msra.mxu0 0
        %440 = vmatprep.subr.bf16.mxu0 0
        %441 = vmatpush1.bf16.msra.mxu0 0
        %442 = vmatprep.mubr.bf16.mxu0 0
        %443 = vmatmul.mubr.bf16.gmra.mrb[0].mxu0 %v408
        %v444 = vpop.f32.mrb[0].mxu0
        %v445 = vadd.f32 %v393, %v444
        %v446 = vpop.f32.mrb[0].mxu0
        %v447 = vpop.f32.mrb[0].mxu0
        %v448 = vpop.f32.mrb[0].mxu0
        %449 = vdwg.mxu0
        %v450 = vpack.c.bf16 %v445, %v445
        %452 = vrot.lane.b32.xlu0 %v450, 120
        %v453 = vpop.permute.xlu0 %452
        %454 = vrot.lane.b32.xlu0 %v450, 112
        %v455 = vpop.permute.xlu0 %454
        %456 = vrot.lane.b32.xlu0 %v450, 104
        %v457 = vpop.permute.xlu0 %456
        %v459 = vunpack.c.l.s4 1983009808
        %v460 = vunpack.c.0.s8 %v459
        %v461 = vlaneseq
        %v462 = vshrl.u32 %v461, 7
        %v463 = vsub.s32 %v460, %v462
        %v464 = vrot.slane %v450, %v463
        %v467 = vunpack.c.l.s4 1983009808
        %v468 = vunpack.c.0.s8 %v467
        %v469 = vlaneseq
        %v470 = vshrl.u32 %v469, 7
        %v471 = vsub.s32 %v468, %v470
        %v472 = vrot.slane %v455, %v471
        %v473 = vcombine.low %v464, %v472
        %v474 = vcombine.high %v464, %v472
        %v476 = vunpack.c.l.s4 1934713408
        %v477 = vunpack.c.0.s8 %v476
        %v478 = vlaneseq
        %v479 = vshrl.u32 %v478, 7
        %v480 = vsub.s32 %v477, %v479
        %v481 = vrot.slane %v473, %v480
        %v483 = vunpack.c.l.s4 1934713408
        %v484 = vunpack.c.0.s8 %v483
        %v485 = vlaneseq
        %v486 = vshrl.u32 %v485, 7
        %v487 = vsub.s32 %v484, %v486
        %v488 = vrot.slane %v474, %v487
        %v489 = vcombine.high %v481, 0
        %v490 = vcombine.high %v488, 0
        %v493 = vunpack.c.l.s4 1983009808
        %v494 = vunpack.c.0.s8 %v493
        %v495 = vlaneseq
        %v496 = vshrl.u32 %v495, 7
        %v497 = vsub.s32 %v494, %v496
        %v498 = vrot.slane %v453, %v497
        %v501 = vunpack.c.l.s4 1983009808
        %v502 = vunpack.c.0.s8 %v501
        %v503 = vlaneseq
        %v504 = vshrl.u32 %v503, 7
        %v505 = vsub.s32 %v502, %v504
        %v506 = vrot.slane %v457, %v505
        %v507 = vcombine.low %v498, %v506
        %v508 = vcombine.high %v498, %v506
        %v510 = vunpack.c.l.s4 1934713408
        %v511 = vunpack.c.0.s8 %v510
        %v512 = vlaneseq
        %v513 = vshrl.u32 %v512, 7
        %v514 = vsub.s32 %v511, %v513
        %v515 = vrot.slane %v507, %v514
        %v517 = vunpack.c.l.s4 1934713408
        %v518 = vunpack.c.0.s8 %v517
        %v519 = vlaneseq
        %v520 = vshrl.u32 %v519, 7
        %v521 = vsub.s32 %v518, %v520
        %v522 = vrot.slane %v508, %v521
        %v523 = vcombine.high %v515, 0
        %v524 = vcombine.high %v522, 0
        %v527 = vpack.i.b16 %v515, %v481
        %v529 = vshrl.u32 %v481, 16
        %v530 = vshrl.u32 %v515, 16
        %v531 = vpack.i.b16 %v530, %v529
        %v535 = vpack.i.b16 %v523, %v489
        %v537 = vshrl.u32 %v489, 16
        %v538 = vshrl.u32 %v523, 16
        %v539 = vpack.i.b16 %v538, %v537
        %v543 = vpack.i.b16 %v522, %v488
        %v545 = vshrl.u32 %v488, 16
        %v546 = vshrl.u32 %v522, 16
        %v547 = vpack.i.b16 %v546, %v545
        %v551 = vpack.i.b16 %v524, %v490
        %v553 = vshrl.u32 %v490, 16
        %v554 = vshrl.u32 %v524, 16
        %v555 = vpack.i.b16 %v554, %v553
        %v557 = vcombine.low %v527, %v543
        %v559 = vunpack.c.l.s4 1983009808
        %v560 = vunpack.c.0.s8 %v559
        %v561 = vlaneseq
        %v562 = vshrl.u32 %v561, 7
        %v563 = vsub.s32 %v560, %v562
        %v564 = vrot.slane %v557, %v563
        %v565 = vcombine.low %v535, %v551
        %v567 = vunpack.c.l.s4 1983009808
        %v568 = vunpack.c.0.s8 %v567
        %v569 = vlaneseq
        %v570 = vshrl.u32 %v569, 7
        %v571 = vsub.s32 %v568, %v570
        %v572 = vrot.slane %v565, %v571
        %v573 = vcombine.low %v564, %v572
        %v575 = vunpack.c.l.s4 1934713408
        %v576 = vunpack.c.0.s8 %v575
        %v577 = vlaneseq
        %v578 = vshrl.u32 %v577, 7
        %v579 = vsub.s32 %v576, %v578
        %v580 = vrot.slane %v573, %v579
        %v581 = vcombine.high %v580, 0
        %v582 = vcombine.low %v531, %v547
        %v584 = vunpack.c.l.s4 1983009808
        %v585 = vunpack.c.0.s8 %v584
        %v586 = vlaneseq
        %v587 = vshrl.u32 %v586, 7
        %v588 = vsub.s32 %v585, %v587
        %v589 = vrot.slane %v582, %v588
        %v590 = vcombine.low %v539, %v555
        %v592 = vunpack.c.l.s4 1983009808
        %v593 = vunpack.c.0.s8 %v592
        %v594 = vlaneseq
        %v595 = vshrl.u32 %v594, 7
        %v596 = vsub.s32 %v593, %v595
        %v597 = vrot.slane %v590, %v596
        %v598 = vcombine.low %v589, %v597
        %v600 = vunpack.c.l.s4 1934713408
        %v601 = vunpack.c.0.s8 %v600
        %v602 = vlaneseq
        %v603 = vshrl.u32 %v602, 7
        %v604 = vsub.s32 %v601, %v603
        %v605 = vrot.slane %v598, %v604
        %v606 = vcombine.high %v605, 0
        %v609 = vpack.i.b16 %v605, %v580
        %v610 = vshrl.u32 %v580, 16
        %v611 = vshrl.u32 %v605, 16
        %v612 = vpack.i.b16 %v611, %v610
        %v615 = vpack.i.b16 %v606, %v581
        %v616 = vshrl.u32 %v581, 16
        %v617 = vshrl.u32 %v606, 16
        %v618 = vpack.i.b16 %v617, %v616
        %619 = vrot.lane.b32.xlu0 %v450, 96
        %v620 = vpop.permute.xlu0 %619
        %621 = vrot.lane.b32.xlu0 %v453, 96
        %v622 = vpop.permute.xlu0 %621
        %623 = vrot.lane.b32.xlu0 %v455, 96
        %v624 = vpop.permute.xlu0 %623
        %625 = vrot.lane.b32.xlu0 %v457, 96
        %v626 = vpop.permute.xlu0 %625
        %v629 = vunpack.c.l.s4 1983009808
        %v630 = vunpack.c.0.s8 %v629
        %v631 = vlaneseq
        %v632 = vshrl.u32 %v631, 7
        %v633 = vsub.s32 %v630, %v632
        %v634 = vrot.slane %v620, %v633
        %v637 = vunpack.c.l.s4 1983009808
        %v638 = vunpack.c.0.s8 %v637
        %v639 = vlaneseq
        %v640 = vshrl.u32 %v639, 7
        %v641 = vsub.s32 %v638, %v640
        %v642 = vrot.slane %v624, %v641
        %v643 = vcombine.low %v634, %v642
        %v644 = vcombine.high %v634, %v642
        %v646 = vunpack.c.l.s4 1934713408
        %v647 = vunpack.c.0.s8 %v646
        %v648 = vlaneseq
        %v649 = vshrl.u32 %v648, 7
        %v650 = vsub.s32 %v647, %v649
        %v651 = vrot.slane %v643, %v650
        %v653 = vunpack.c.l.s4 1934713408
        %v654 = vunpack.c.0.s8 %v653
        %v655 = vlaneseq
        %v656 = vshrl.u32 %v655, 7
        %v657 = vsub.s32 %v654, %v656
        %v658 = vrot.slane %v644, %v657
        %v659 = vcombine.high %v651, 0
        %v660 = vcombine.high %v658, 0
        %v663 = vunpack.c.l.s4 1983009808
        %v664 = vunpack.c.0.s8 %v663
        %v665 = vlaneseq
        %v666 = vshrl.u32 %v665, 7
        %v667 = vsub.s32 %v664, %v666
        %v668 = vrot.slane %v622, %v667
        %v671 = vunpack.c.l.s4 1983009808
        %v672 = vunpack.c.0.s8 %v671
        %v673 = vlaneseq
        %v674 = vshrl.u32 %v673, 7
        %v675 = vsub.s32 %v672, %v674
        %v676 = vrot.slane %v626, %v675
        %v677 = vcombine.low %v668, %v676
        %v678 = vcombine.high %v668, %v676
        %v680 = vunpack.c.l.s4 1934713408
        %v681 = vunpack.c.0.s8 %v680
        %v682 = vlaneseq
        %v683 = vshrl.u32 %v682, 7
        %v684 = vsub.s32 %v681, %v683
        %v685 = vrot.slane %v677, %v684
        %v687 = vunpack.c.l.s4 1934713408
        %v688 = vunpack.c.0.s8 %v687
        %v689 = vlaneseq
        %v690 = vshrl.u32 %v689, 7
        %v691 = vsub.s32 %v688, %v690
        %v692 = vrot.slane %v678, %v691
        %v693 = vcombine.high %v685, 0
        %v694 = vcombine.high %v692, 0
        %v697 = vpack.i.b16 %v685, %v651
        %v699 = vshrl.u32 %v651, 16
        %v700 = vshrl.u32 %v685, 16
        %v701 = vpack.i.b16 %v700, %v699
        %v705 = vpack.i.b16 %v693, %v659
        %v707 = vshrl.u32 %v659, 16
        %v708 = vshrl.u32 %v693, 16
        %v709 = vpack.i.b16 %v708, %v707
        %v713 = vpack.i.b16 %v692, %v658
        %v715 = vshrl.u32 %v658, 16
        %v716 = vshrl.u32 %v692, 16
        %v717 = vpack.i.b16 %v716, %v715
        %v721 = vpack.i.b16 %v694, %v660
        %v723 = vshrl.u32 %v660, 16
        %v724 = vshrl.u32 %v694, 16
        %v725 = vpack.i.b16 %v724, %v723
        %v727 = vcombine.low %v697, %v713
        %v729 = vunpack.c.l.s4 1983009808
        %v730 = vunpack.c.0.s8 %v729
        %v731 = vlaneseq
        %v732 = vshrl.u32 %v731, 7
        %v733 = vsub.s32 %v730, %v732
        %v734 = vrot.slane %v727, %v733
        %v735 = vcombine.low %v705, %v721
        %v737 = vunpack.c.l.s4 1983009808
        %v738 = vunpack.c.0.s8 %v737
        %v739 = vlaneseq
        %v740 = vshrl.u32 %v739, 7
        %v741 = vsub.s32 %v738, %v740
        %v742 = vrot.slane %v735, %v741
        %v743 = vcombine.low %v734, %v742
        %v745 = vunpack.c.l.s4 1934713408
        %v746 = vunpack.c.0.s8 %v745
        %v747 = vlaneseq
        %v748 = vshrl.u32 %v747, 7
        %v749 = vsub.s32 %v746, %v748
        %v750 = vrot.slane %v743, %v749
        %v751 = vcombine.high %v750, 0
        %v752 = vcombine.low %v701, %v717
        %v754 = vunpack.c.l.s4 1983009808
        %v755 = vunpack.c.0.s8 %v754
        %v756 = vlaneseq
        %v757 = vshrl.u32 %v756, 7
        %v758 = vsub.s32 %v755, %v757
        %v759 = vrot.slane %v752, %v758
        %v760 = vcombine.low %v709, %v725
        %v762 = vunpack.c.l.s4 1983009808
        %v763 = vunpack.c.0.s8 %v762
        %v764 = vlaneseq
        %v765 = vshrl.u32 %v764, 7
        %v766 = vsub.s32 %v763, %v765
        %v767 = vrot.slane %v760, %v766
        %v768 = vcombine.low %v759, %v767
        %v770 = vunpack.c.l.s4 1934713408
        %v771 = vunpack.c.0.s8 %v770
        %v772 = vlaneseq
        %v773 = vshrl.u32 %v772, 7
        %v774 = vsub.s32 %v771, %v773
        %v775 = vrot.slane %v768, %v774
        %v776 = vcombine.high %v775, 0
        %v779 = vpack.i.b16 %v775, %v750
        %v780 = vshrl.u32 %v750, 16
        %v781 = vshrl.u32 %v775, 16
        %v782 = vpack.i.b16 %v781, %v780
        %v785 = vpack.i.b16 %v776, %v751
        %v786 = vshrl.u32 %v751, 16
        %v787 = vshrl.u32 %v776, 16
        %v788 = vpack.i.b16 %v787, %v786
        %789 = vrot.lane.b32.xlu0 %v450, 64
        %v790 = vpop.permute.xlu0 %789
        %791 = vrot.lane.b32.xlu0 %v453, 64
        %v792 = vpop.permute.xlu0 %791
        %793 = vrot.lane.b32.xlu0 %v455, 64
        %v794 = vpop.permute.xlu0 %793
        %795 = vrot.lane.b32.xlu0 %v457, 64
        %v796 = vpop.permute.xlu0 %795
        %v799 = vunpack.c.l.s4 1983009808
        %v800 = vunpack.c.0.s8 %v799
        %v801 = vlaneseq
        %v802 = vshrl.u32 %v801, 7
        %v803 = vsub.s32 %v800, %v802
        %v804 = vrot.slane %v790, %v803
        %v807 = vunpack.c.l.s4 1983009808
        %v808 = vunpack.c.0.s8 %v807
        %v809 = vlaneseq
        %v810 = vshrl.u32 %v809, 7
        %v811 = vsub.s32 %v808, %v810
        %v812 = vrot.slane %v794, %v811
        %v813 = vcombine.low %v804, %v812
        %v814 = vcombine.high %v804, %v812
        %v816 = vunpack.c.l.s4 1934713408
        %v817 = vunpack.c.0.s8 %v816
        %v818 = vlaneseq
        %v819 = vshrl.u32 %v818, 7
        %v820 = vsub.s32 %v817, %v819
        %v821 = vrot.slane %v813, %v820
        %v823 = vunpack.c.l.s4 1934713408
        %v824 = vunpack.c.0.s8 %v823
        %v825 = vlaneseq
        %v826 = vshrl.u32 %v825, 7
        %v827 = vsub.s32 %v824, %v826
        %v828 = vrot.slane %v814, %v827
        %v829 = vcombine.high %v821, 0
        %v830 = vcombine.high %v828, 0
        %v833 = vunpack.c.l.s4 1983009808
        %v834 = vunpack.c.0.s8 %v833
        %v835 = vlaneseq
        %v836 = vshrl.u32 %v835, 7
        %v837 = vsub.s32 %v834, %v836
        %v838 = vrot.slane %v792, %v837
        %v841 = vunpack.c.l.s4 1983009808
        %v842 = vunpack.c.0.s8 %v841
        %v843 = vlaneseq
        %v844 = vshrl.u32 %v843, 7
        %v845 = vsub.s32 %v842, %v844
        %v846 = vrot.slane %v796, %v845
        %v847 = vcombine.low %v838, %v846
        %v848 = vcombine.high %v838, %v846
        %v850 = vunpack.c.l.s4 1934713408
        %v851 = vunpack.c.0.s8 %v850
        %v852 = vlaneseq
        %v853 = vshrl.u32 %v852, 7
        %v854 = vsub.s32 %v851, %v853
        %v855 = vrot.slane %v847, %v854
        %v857 = vunpack.c.l.s4 1934713408
        %v858 = vunpack.c.0.s8 %v857
        %v859 = vlaneseq
        %v860 = vshrl.u32 %v859, 7
        %v861 = vsub.s32 %v858, %v860
        %v862 = vrot.slane %v848, %v861
        %v863 = vcombine.high %v855, 0
        %v864 = vcombine.high %v862, 0
        %v867 = vpack.i.b16 %v855, %v821
        %v869 = vshrl.u32 %v821, 16
        %v870 = vshrl.u32 %v855, 16
        %v871 = vpack.i.b16 %v870, %v869
        %v875 = vpack.i.b16 %v863, %v829
        %v877 = vshrl.u32 %v829, 16
        %v878 = vshrl.u32 %v863, 16
        %v879 = vpack.i.b16 %v878, %v877
        %v883 = vpack.i.b16 %v862, %v828
        %v885 = vshrl.u32 %v828, 16
        %v886 = vshrl.u32 %v862, 16
        %v887 = vpack.i.b16 %v886, %v885
        %v891 = vpack.i.b16 %v864, %v830
        %v893 = vshrl.u32 %v830, 16
        %v894 = vshrl.u32 %v864, 16
        %v895 = vpack.i.b16 %v894, %v893
        %v897 = vcombine.low %v867, %v883
        %v899 = vunpack.c.l.s4 1983009808
        %v900 = vunpack.c.0.s8 %v899
        %v901 = vlaneseq
        %v902 = vshrl.u32 %v901, 7
        %v903 = vsub.s32 %v900, %v902
        %v904 = vrot.slane %v897, %v903
        %v905 = vcombine.low %v875, %v891
        %v907 = vunpack.c.l.s4 1983009808
        %v908 = vunpack.c.0.s8 %v907
        %v909 = vlaneseq
        %v910 = vshrl.u32 %v909, 7
        %v911 = vsub.s32 %v908, %v910
        %v912 = vrot.slane %v905, %v911
        %v913 = vcombine.low %v904, %v912
        %v915 = vunpack.c.l.s4 1934713408
        %v916 = vunpack.c.0.s8 %v915
        %v917 = vlaneseq
        %v918 = vshrl.u32 %v917, 7
        %v919 = vsub.s32 %v916, %v918
        %v920 = vrot.slane %v913, %v919
        %v921 = vcombine.high %v920, 0
        %v922 = vcombine.low %v871, %v887
        %v924 = vunpack.c.l.s4 1983009808
        %v925 = vunpack.c.0.s8 %v924
        %v926 = vlaneseq
        %v927 = vshrl.u32 %v926, 7
        %v928 = vsub.s32 %v925, %v927
        %v929 = vrot.slane %v922, %v928
        %v930 = vcombine.low %v879, %v895
        %v932 = vunpack.c.l.s4 1983009808
        %v933 = vunpack.c.0.s8 %v932
        %v934 = vlaneseq
        %v935 = vshrl.u32 %v934, 7
        %v936 = vsub.s32 %v933, %v935
        %v937 = vrot.slane %v930, %v936
        %v938 = vcombine.low %v929, %v937
        %v940 = vunpack.c.l.s4 1934713408
        %v941 = vunpack.c.0.s8 %v940
        %v942 = vlaneseq
        %v943 = vshrl.u32 %v942, 7
        %v944 = vsub.s32 %v941, %v943
        %v945 = vrot.slane %v938, %v944
        %v946 = vcombine.high %v945, 0
        %v949 = vpack.i.b16 %v945, %v920
        %v950 = vshrl.u32 %v920, 16
        %v951 = vshrl.u32 %v945, 16
        %v952 = vpack.i.b16 %v951, %v950
        %v955 = vpack.i.b16 %v946, %v921
        %v956 = vshrl.u32 %v921, 16
        %v957 = vshrl.u32 %v946, 16
        %v958 = vpack.i.b16 %v957, %v956
        %vm959 = vcmask 64512
        %v961 = vsel %vm959, %v609, 0
        %v964 = vsel %vm959, %v779, 0
        %966 = vmatprep.subr.bf16.mxu0 0
        %967 = vmatpush1.bf16.xpose.msra.mxu0 %v964
        %968 = vmatprep.subr.bf16.mxu0 0
        %969 = vmatpush1.bf16.xpose.msra.mxu0 0
        %970 = vmatprep.subr.bf16.mxu0 0
        %971 = vmatpush1.bf16.xpose.msra.mxu0 0
        %972 = vmatprep.subr.bf16.mxu0 0
        %973 = vmatpush1.bf16.xpose.msra.mxu0 0
        %974 = vmatprep.subr.bf16.mxu0 0
        %975 = vmatpush1.bf16.xpose.msra.mxu0 0
        %976 = vmatprep.subr.bf16.mxu0 0
        %977 = vmatpush1.bf16.xpose.msra.mxu0 0
        %978 = vmatprep.subr.bf16.mxu0 0
        %979 = vmatpush1.bf16.xpose.msra.mxu0 0
        %980 = vmatprep.subr.bf16.mxu0 0
        %981 = vmatpush1.bf16.xpose.msra.mxu0 0
        %982 = vmatprep.subr.bf16.mxu0 0
        %983 = vmatpush1.bf16.xpose.msra.mxu0 0
        %984 = vmatprep.subr.bf16.mxu0 0
        %985 = vmatpush1.bf16.xpose.msra.mxu0 0
        %986 = vmatprep.subr.bf16.mxu0 0
        %987 = vmatpush1.bf16.xpose.msra.mxu0 0
        %988 = vmatprep.subr.bf16.mxu0 0
        %989 = vmatpush1.bf16.xpose.msra.mxu0 0
        %990 = vmatprep.subr.bf16.mxu0 0
        %991 = vmatpush1.bf16.xpose.msra.mxu0 0
        %992 = vmatprep.subr.bf16.mxu0 0
        %993 = vmatpush1.bf16.xpose.msra.mxu0 0
        %994 = vmatprep.subr.bf16.mxu0 0
        %995 = vmatpush1.bf16.xpose.msra.mxu0 0
        %996 = vmatprep.subr.bf16.mxu0 0
        %997 = vmatpush1.bf16.xpose.msra.mxu0 0
        %998 = vmatprep.mubr.bf16.mxu0 0
        %999 = vmatmul.mubr.bf16.gmra.mrb[0].mxu0 %v961
        %v1000 = vpop.f32.mrb[0].mxu0
        %v1001 = vadd.f32 0.0, %v1000
        %v1002 = vpop.f32.mrb[0].mxu0
        %v1003 = vpop.f32.mrb[0].mxu0
        %v1004 = vpop.f32.mrb[0].mxu0
        %1005 = vdwg.mxu0
        %v1007 = vsel %vm959, %v612, 0
        %v1010 = vsel %vm959, %v782, 0
        %1012 = vmatprep.subr.bf16.mxu0 0
        %1013 = vmatpush1.bf16.xpose.msra.mxu0 %v1010
        %1014 = vmatprep.subr.bf16.mxu0 0
        %1015 = vmatpush1.bf16.xpose.msra.mxu0 0
        %1016 = vmatprep.subr.bf16.mxu0 0
        %1017 = vmatpush1.bf16.xpose.msra.mxu0 0
        %1018 = vmatprep.subr.bf16.mxu0 0
        %1019 = vmatpush1.bf16.xpose.msra.mxu0 0
        %1020 = vmatprep.subr.bf16.mxu0 0
        %1021 = vmatpush1.bf16.xpose.msra.mxu0 0
        %1022 = vmatprep.subr.bf16.mxu0 0
        %1023 = vmatpush1.bf16.xpose.msra.mxu0 0
        %1024 = vmatprep.subr.bf16.mxu0 0
        %1025 = vmatpush1.bf16.xpose.msra.mxu0 0
        %1026 = vmatprep.subr.bf16.mxu0 0
        %1027 = vmatpush1.bf16.xpose.msra.mxu0 0
        %1028 = vmatprep.subr.bf16.mxu0 0
        %1029 = vmatpush1.bf16.xpose.msra.mxu0 0
        %1030 = vmatprep.subr.bf16.mxu0 0
        %1031 = vmatpush1.bf16.xpose.msra.mxu0 0
        %1032 = vmatprep.subr.bf16.mxu0 0
        %1033 = vmatpush1.bf16.xpose.msra.mxu0 0
        %1034 = vmatprep.subr.bf16.mxu0 0
        %1035 = vmatpush1.bf16.xpose.msra.mxu0 0
        %1036 = vmatprep.subr.bf16.mxu0 0
        %1037 = vmatpush1.bf16.xpose.msra.mxu0 0
        %1038 = vmatprep.subr.bf16.mxu0 0
        %1039 = vmatpush1.bf16.xpose.msra.mxu0 0
        %1040 = vmatprep.subr.bf16.mxu0 0
        %1041 = vmatpush1.bf16.xpose.msra.mxu0 0
        %1042 = vmatprep.subr.bf16.mxu0 0
        %1043 = vmatpush1.bf16.xpose.msra.mxu0 0
        %1044 = vmatprep.mubr.bf16.mxu0 0
        %1045 = vmatmul.mubr.bf16.gmra.mrb[0].mxu0 %v1007
        %v1046 = vpop.f32.mrb[0].mxu0
        %v1047 = vadd.f32 0.0, %v1046
        %v1048 = vpop.f32.mrb[0].mxu0
        %v1049 = vpop.f32.mrb[0].mxu0
        %v1050 = vpop.f32.mrb[0].mxu0
        %1051 = vdwg.mxu0
        %v1053 = vsel %vm959, %v615, 0
        %v1056 = vsel %vm959, %v785, 0
        %1058 = vmatprep.subr.bf16.mxu0 0
        %1059 = vmatpush1.bf16.xpose.msra.mxu0 %v1056
        %1060 = vmatprep.subr.bf16.mxu0 0
        %1061 = vmatpush1.bf16.xpose.msra.mxu0 0
        %1062 = vmatprep.subr.bf16.mxu0 0
        %1063 = vmatpush1.bf16.xpose.msra.mxu0 0
        %1064 = vmatprep.subr.bf16.mxu0 0
        %1065 = vmatpush1.bf16.xpose.msra.mxu0 0
        %1066 = vmatprep.subr.bf16.mxu0 0
        %1067 = vmatpush1.bf16.xpose.msra.mxu0 0
        %1068 = vmatprep.subr.bf16.mxu0 0
        %1069 = vmatpush1.bf16.xpose.msra.mxu0 0
        %1070 = vmatprep.subr.bf16.mxu0 0
        %1071 = vmatpush1.bf16.xpose.msra.mxu0 0
        %1072 = vmatprep.subr.bf16.mxu0 0
        %1073 = vmatpush1.bf16.xpose.msra.mxu0 0
        %1074 = vmatprep.subr.bf16.mxu0 0
        %1075 = vmatpush1.bf16.xpose.msra.mxu0 0
        %1076 = vmatprep.subr.bf16.mxu0 0
        %1077 = vmatpush1.bf16.xpose.msra.mxu0 0
        %1078 = vmatprep.subr.bf16.mxu0 0
        %1079 = vmatpush1.bf16.xpose.msra.mxu0 0
        %1080 = vmatprep.subr.bf16.mxu0 0
        %1081 = vmatpush1.bf16.xpose.msra.mxu0 0
        %1082 = vmatprep.subr.bf16.mxu0 0
        %1083 = vmatpush1.bf16.xpose.msra.mxu0 0
        %1084 = vmatprep.subr.bf16.mxu0 0
        %1085 = vmatpush1.bf16.xpose.msra.mxu0 0
        %1086 = vmatprep.subr.bf16.mxu0 0
        %1087 = vmatpush1.bf16.xpose.msra.mxu0 0
        %1088 = vmatprep.subr.bf16.mxu0 0
        %1089 = vmatpush1.bf16.xpose.msra.mxu0 0
        %1090 = vmatprep.mubr.bf16.mxu0 0
        %1091 = vmatmul.mubr.bf16.gmra.mrb[0].mxu0 %v1053
        %v1092 = vpop.f32.mrb[0].mxu0
        %v1093 = vadd.f32 0.0, %v1092
        %v1094 = vpop.f32.mrb[0].mxu0
        %v1095 = vpop.f32.mrb[0].mxu0
        %v1096 = vpop.f32.mrb[0].mxu0
        %1097 = vdwg.mxu0
        %v1099 = vsel %vm959, %v618, 0
        %v1102 = vsel %vm959, %v788, 0
        %1104 = vmatprep.subr.bf16.mxu0 0
        %1105 = vmatpush1.bf16.xpose.msra.mxu0 %v1102
        %1106 = vmatprep.subr.bf16.mxu0 0
        %1107 = vmatpush1.bf16.xpose.msra.mxu0 0
        %1108 = vmatprep.subr.bf16.mxu0 0
        %1109 = vmatpush1.bf16.xpose.msra.mxu0 0
        %1110 = vmatprep.subr.bf16.mxu0 0
        %1111 = vmatpush1.bf16.xpose.msra.mxu0 0
        %1112 = vmatprep.subr.bf16.mxu0 0
        %1113 = vmatpush1.bf16.xpose.msra.mxu0 0
        %1114 = vmatprep.subr.bf16.mxu0 0
        %1115 = vmatpush1.bf16.xpose.msra.mxu0 0
        %1116 = vmatprep.subr.bf16.mxu0 0
        %1117 = vmatpush1.bf16.xpose.msra.mxu0 0
        %1118 = vmatprep.subr.bf16.mxu0 0
        %1119 = vmatpush1.bf16.xpose.msra.mxu0 0
        %1120 = vmatprep.subr.bf16.mxu0 0
        %1121 = vmatpush1.bf16.xpose.msra.mxu0 0
        %1122 = vmatprep.subr.bf16.mxu0 0
        %1123 = vmatpush1.bf16.xpose.msra.mxu0 0
        %1124 = vmatprep.subr.bf16.mxu0 0
        %1125 = vmatpush1.bf16.xpose.msra.mxu0 0
        %1126 = vmatprep.subr.bf16.mxu0 0
        %1127 = vmatpush1.bf16.xpose.msra.mxu0 0
        %1128 = vmatprep.subr.bf16.mxu0 0
        %1129 = vmatpush1.bf16.xpose.msra.mxu0 0
        %1130 = vmatprep.subr.bf16.mxu0 0
        %1131 = vmatpush1.bf16.xpose.msra.mxu0 0
        %1132 = vmatprep.subr.bf16.mxu0 0
        %1133 = vmatpush1.bf16.xpose.msra.mxu0 0
        %1134 = vmatprep.subr.bf16.mxu0 0
        %1135 = vmatpush1.bf16.xpose.msra.mxu0 0
        %1136 = vmatprep.mubr.bf16.mxu0 0
        %1137 = vmatmul.mubr.bf16.gmra.mrb[0].mxu0 %v1099
        %v1138 = vpop.f32.mrb[0].mxu0
        %v1139 = vadd.f32 0.0, %v1138
        %v1140 = vpop.f32.mrb[0].mxu0
        %v1141 = vpop.f32.mrb[0].mxu0
        %v1142 = vpop.f32.mrb[0].mxu0
        %1143 = vdwg.mxu0
        %v1144 = vsel %vm959, %v1001, -inf
        %1145 = vmax.xlane.f32.xlu0 %v1144
        %v1146 = vpop.xlane.xlu0 %1145
        %v1147 = vsel %vm959, %v1047, -inf
        %1148 = vmax.xlane.f32.xlu0 %v1147
        %v1149 = vpop.xlane.xlu0 %1148
        %v1150 = vsel %vm959, %v1093, -inf
        %1151 = vmax.xlane.f32.xlu0 %v1150
        %v1152 = vpop.xlane.xlu0 %1151
        %v1153 = vsel %vm959, %v1139, -inf
        %1154 = vmax.xlane.f32.xlu0 %v1153
        %v1155 = vpop.xlane.xlu0 %1154
        %v1156 = vsub.f32 %v1001, %v1146
        %v1157 = vsub.f32 %v1047, %v1149
        %v1158 = vsub.f32 %v1093, %v1152
        %v1159 = vsub.f32 %v1139, %v1155
        %v1160 = vmul.f32 %v1156, 1.442695
        %v1161 = vpow.pop %v1160
        %v1162 = vmul.f32 %v1157, 1.442695
        %v1163 = vpow.pop %v1162
        %v1164 = vmul.f32 %v1158, 1.442695
        %v1165 = vpow.pop %v1164
        %v1166 = vmul.f32 %v1159, 1.442695
        %v1167 = vpow.pop %v1166
        %v1168 = vsel %vm959, %v1161, 0.0
        %1169 = vadd.xlane.f32.xlu0 %v1168
        %v1170 = vpop.xlane.xlu0 %1169
        %v1171 = vsel %vm959, %v1163, 0.0
        %1172 = vadd.xlane.f32.xlu0 %v1171
        %v1173 = vpop.xlane.xlu0 %1172
        %v1174 = vsel %vm959, %v1165, 0.0
        %1175 = vadd.xlane.f32.xlu0 %v1174
        %v1176 = vpop.xlane.xlu0 %1175
        %v1177 = vsel %vm959, %v1167, 0.0
        %1178 = vadd.xlane.f32.xlu0 %v1177
        %v1179 = vpop.xlane.xlu0 %1178
        %v1180 = vrcp.pop %v1170
        %v1181 = vrcp.pop %v1173
        %v1182 = vrcp.pop %v1176
        %v1183 = vrcp.pop %v1179
        %v1184 = vmul.f32 %v1161, %v1180
        %v1185 = vmul.f32 %v1163, %v1181
        %v1186 = vmul.f32 %v1165, %v1182
        %v1187 = vmul.f32 %v1167, %v1183
        %v1188 = vpack.c.bf16 %v1184, %v1184
        %v1189 = vpack.c.bf16 %v1185, %v1185
        %v1190 = vpack.c.bf16 %v1186, %v1186
        %v1191 = vpack.c.bf16 %v1187, %v1187
        %v1193 = vsel %vm959, %v1188, 0
        %vm1195 = vcmask 1043456
        %v1197 = vsel %vm1195, %v949, 0
        %1199 = vmatprep.subr.bf16.mxu0 0
        %1200 = vmatpush1.bf16.msra.mxu0 %v1197
        %1201 = vmatprep.subr.bf16.mxu0 0
        %1202 = vmatpush1.bf16.msra.mxu0 0
        %1203 = vmatprep.subr.bf16.mxu0 0
        %1204 = vmatpush1.bf16.msra.mxu0 0
        %1205 = vmatprep.subr.bf16.mxu0 0
        %1206 = vmatpush1.bf16.msra.mxu0 0
        %1207 = vmatprep.subr.bf16.mxu0 0
        %1208 = vmatpush1.bf16.msra.mxu0 0
        %1209 = vmatprep.subr.bf16.mxu0 0
        %1210 = vmatpush1.bf16.msra.mxu0 0
        %1211 = vmatprep.subr.bf16.mxu0 0
        %1212 = vmatpush1.bf16.msra.mxu0 0
        %1213 = vmatprep.subr.bf16.mxu0 0
        %1214 = vmatpush1.bf16.msra.mxu0 0
        %1215 = vmatprep.subr.bf16.mxu0 0
        %1216 = vmatpush1.bf16.msra.mxu0 0
        %1217 = vmatprep.subr.bf16.mxu0 0
        %1218 = vmatpush1.bf16.msra.mxu0 0
        %1219 = vmatprep.subr.bf16.mxu0 0
        %1220 = vmatpush1.bf16.msra.mxu0 0
        %1221 = vmatprep.subr.bf16.mxu0 0
        %1222 = vmatpush1.bf16.msra.mxu0 0
        %1223 = vmatprep.subr.bf16.mxu0 0
        %1224 = vmatpush1.bf16.msra.mxu0 0
        %1225 = vmatprep.subr.bf16.mxu0 0
        %1226 = vmatpush1.bf16.msra.mxu0 0
        %1227 = vmatprep.subr.bf16.mxu0 0
        %1228 = vmatpush1.bf16.msra.mxu0 0
        %1229 = vmatprep.subr.bf16.mxu0 0
        %1230 = vmatpush1.bf16.msra.mxu0 0
        %1231 = vmatprep.mubr.bf16.mxu0 0
        %1232 = vmatmul.mubr.bf16.gmra.mrb[0].mxu0 %v1193
        %v1233 = vpop.f32.mrb[0].mxu0
        %v1234 = vadd.f32 0.0, %v1233
        %v1235 = vpop.f32.mrb[0].mxu0
        %v1236 = vpop.f32.mrb[0].mxu0
        %v1237 = vpop.f32.mrb[0].mxu0
        %1238 = vdwg.mxu0
        %v1240 = vsel %vm959, %v1189, 0
        %v1243 = vsel %vm1195, %v952, 0
        %1245 = vmatprep.subr.bf16.mxu0 0
        %1246 = vmatpush1.bf16.msra.mxu0 %v1243
        %1247 = vmatprep.subr.bf16.mxu0 0
        %1248 = vmatpush1.bf16.msra.mxu0 0
        %1249 = vmatprep.subr.bf16.mxu0 0
        %1250 = vmatpush1.bf16.msra.mxu0 0
        %1251 = vmatprep.subr.bf16.mxu0 0
        %1252 = vmatpush1.bf16.msra.mxu0 0
        %1253 = vmatprep.subr.bf16.mxu0 0
        %1254 = vmatpush1.bf16.msra.mxu0 0
        %1255 = vmatprep.subr.bf16.mxu0 0
        %1256 = vmatpush1.bf16.msra.mxu0 0
        %1257 = vmatprep.subr.bf16.mxu0 0
        %1258 = vmatpush1.bf16.msra.mxu0 0
        %1259 = vmatprep.subr.bf16.mxu0 0
        %1260 = vmatpush1.bf16.msra.mxu0 0
        %1261 = vmatprep.subr.bf16.mxu0 0
        %1262 = vmatpush1.bf16.msra.mxu0 0
        %1263 = vmatprep.subr.bf16.mxu0 0
        %1264 = vmatpush1.bf16.msra.mxu0 0
        %1265 = vmatprep.subr.bf16.mxu0 0
        %1266 = vmatpush1.bf16.msra.mxu0 0
        %1267 = vmatprep.subr.bf16.mxu0 0
        %1268 = vmatpush1.bf16.msra.mxu0 0
        %1269 = vmatprep.subr.bf16.mxu0 0
        %1270 = vmatpush1.bf16.msra.mxu0 0
        %1271 = vmatprep.subr.bf16.mxu0 0
        %1272 = vmatpush1.bf16.msra.mxu0 0
        %1273 = vmatprep.subr.bf16.mxu0 0
        %1274 = vmatpush1.bf16.msra.mxu0 0
        %1275 = vmatprep.subr.bf16.mxu0 0
        %1276 = vmatpush1.bf16.msra.mxu0 0
        %1277 = vmatprep.mubr.bf16.mxu0 0
        %1278 = vmatmul.mubr.bf16.gmra.mrb[0].mxu0 %v1240
        %v1279 = vpop.f32.mrb[0].mxu0
        %v1280 = vadd.f32 0.0, %v1279
        %v1281 = vpop.f32.mrb[0].mxu0
        %v1282 = vpop.f32.mrb[0].mxu0
        %v1283 = vpop.f32.mrb[0].mxu0
        %1284 = vdwg.mxu0
        %v1286 = vsel %vm959, %v1190, 0
        %v1289 = vsel %vm1195, %v955, 0
        %1291 = vmatprep.subr.bf16.mxu0 0
        %1292 = vmatpush1.bf16.msra.mxu0 %v1289
        %1293 = vmatprep.subr.bf16.mxu0 0
        %1294 = vmatpush1.bf16.msra.mxu0 0
        %1295 = vmatprep.subr.bf16.mxu0 0
        %1296 = vmatpush1.bf16.msra.mxu0 0
        %1297 = vmatprep.subr.bf16.mxu0 0
        %1298 = vmatpush1.bf16.msra.mxu0 0
        %1299 = vmatprep.subr.bf16.mxu0 0
        %1300 = vmatpush1.bf16.msra.mxu0 0
        %1301 = vmatprep.subr.bf16.mxu0 0
        %1302 = vmatpush1.bf16.msra.mxu0 0
        %1303 = vmatprep.subr.bf16.mxu0 0
        %1304 = vmatpush1.bf16.msra.mxu0 0
        %1305 = vmatprep.subr.bf16.mxu0 0
        %1306 = vmatpush1.bf16.msra.mxu0 0
        %1307 = vmatprep.subr.bf16.mxu0 0
        %1308 = vmatpush1.bf16.msra.mxu0 0
        %1309 = vmatprep.subr.bf16.mxu0 0
        %1310 = vmatpush1.bf16.msra.mxu0 0
        %1311 = vmatprep.subr.bf16.mxu0 0
        %1312 = vmatpush1.bf16.msra.mxu0 0
        %1313 = vmatprep.subr.bf16.mxu0 0
        %1314 = vmatpush1.bf16.msra.mxu0 0
        %1315 = vmatprep.subr.bf16.mxu0 0
        %1316 = vmatpush1.bf16.msra.mxu0 0
        %1317 = vmatprep.subr.bf16.mxu0 0
        %1318 = vmatpush1.bf16.msra.mxu0 0
        %1319 = vmatprep.subr.bf16.mxu0 0
        %1320 = vmatpush1.bf16.msra.mxu0 0
        %1321 = vmatprep.subr.bf16.mxu0 0
        %1322 = vmatpush1.bf16.msra.mxu0 0
        %1323 = vmatprep.mubr.bf16.mxu0 0
        %1324 = vmatmul.mubr.bf16.gmra.mrb[0].mxu0 %v1286
        %v1325 = vpop.f32.mrb[0].mxu0
        %v1326 = vadd.f32 0.0, %v1325
        %v1327 = vpop.f32.mrb[0].mxu0
        %v1328 = vpop.f32.mrb[0].mxu0
        %v1329 = vpop.f32.mrb[0].mxu0
        %1330 = vdwg.mxu0
        %v1332 = vsel %vm959, %v1191, 0
        %v1335 = vsel %vm1195, %v958, 0
        %1337 = vmatprep.subr.bf16.mxu0 0
        %1338 = vmatpush1.bf16.msra.mxu0 %v1335
        %1339 = vmatprep.subr.bf16.mxu0 0
        %1340 = vmatpush1.bf16.msra.mxu0 0
        %1341 = vmatprep.subr.bf16.mxu0 0
        %1342 = vmatpush1.bf16.msra.mxu0 0
        %1343 = vmatprep.subr.bf16.mxu0 0
        %1344 = vmatpush1.bf16.msra.mxu0 0
        %1345 = vmatprep.subr.bf16.mxu0 0
        %1346 = vmatpush1.bf16.msra.mxu0 0
        %1347 = vmatprep.subr.bf16.mxu0 0
        %1348 = vmatpush1.bf16.msra.mxu0 0
        %1349 = vmatprep.subr.bf16.mxu0 0
        %1350 = vmatpush1.bf16.msra.mxu0 0
        %1351 = vmatprep.subr.bf16.mxu0 0
        %1352 = vmatpush1.bf16.msra.mxu0 0
        %1353 = vmatprep.subr.bf16.mxu0 0
        %1354 = vmatpush1.bf16.msra.mxu0 0
        %1355 = vmatprep.subr.bf16.mxu0 0
        %1356 = vmatpush1.bf16.msra.mxu0 0
        %1357 = vmatprep.subr.bf16.mxu0 0
        %1358 = vmatpush1.bf16.msra.mxu0 0
        %1359 = vmatprep.subr.bf16.mxu0 0
        %1360 = vmatpush1.bf16.msra.mxu0 0
        %1361 = vmatprep.subr.bf16.mxu0 0
        %1362 = vmatpush1.bf16.msra.mxu0 0
        %1363 = vmatprep.subr.bf16.mxu0 0
        %1364 = vmatpush1.bf16.msra.mxu0 0
        %1365 = vmatprep.subr.bf16.mxu0 0
        %1366 = vmatpush1.bf16.msra.mxu0 0
        %1367 = vmatprep.subr.bf16.mxu0 0
        %1368 = vmatpush1.bf16.msra.mxu0 0
        %1369 = vmatprep.mubr.bf16.mxu0 0
        %1370 = vmatmul.mubr.bf16.gmra.mrb[0].mxu0 %v1332
        %v1371 = vpop.f32.mrb[0].mxu0
        %v1372 = vadd.f32 0.0, %v1371
        %v1373 = vpop.f32.mrb[0].mxu0
        %v1374 = vpop.f32.mrb[0].mxu0
        %v1375 = vpop.f32.mrb[0].mxu0
        %1376 = vdwg.mxu0
        %v1377 = vpack.c.bf16 %v1234, %v1234
        %v1379 = vunpack.c.l.s4 1983009808
        %v1380 = vunpack.c.0.s8 %v1379
        %v1381 = vlaneseq
        %v1382 = vshrl.u32 %v1381, 7
        %v1383 = vsub.s32 %v1380, %v1382
        %v1384 = vrot.slane %v1377, %v1383
        %v1385 = vpack.c.bf16 %v1326, %v1326
        %v1387 = vunpack.c.l.s4 1983009808
        %v1388 = vunpack.c.0.s8 %v1387
        %v1389 = vlaneseq
        %v1390 = vshrl.u32 %v1389, 7
        %v1391 = vsub.s32 %v1388, %v1390
        %v1392 = vrot.slane %v1385, %v1391
        %v1393 = vcombine.low %v1384, %v1392
        %v1394 = vcombine.high %v1384, %v1392
        %v1396 = vunpack.c.l.s4 1934713408
        %v1397 = vunpack.c.0.s8 %v1396
        %v1398 = vlaneseq
        %v1399 = vshrl.u32 %v1398, 7
        %v1400 = vsub.s32 %v1397, %v1399
        %v1401 = vrot.slane %v1393, %v1400
        %v1403 = vunpack.c.l.s4 1934713408
        %v1404 = vunpack.c.0.s8 %v1403
        %v1405 = vlaneseq
        %v1406 = vshrl.u32 %v1405, 7
        %v1407 = vsub.s32 %v1404, %v1406
        %v1408 = vrot.slane %v1394, %v1407
        %v1409 = vcombine.high %v1401, 0
        %v1410 = vcombine.high %v1408, 0
        %v1411 = vpack.c.bf16 %v1280, %v1280
        %v1413 = vunpack.c.l.s4 1983009808
        %v1414 = vunpack.c.0.s8 %v1413
        %v1415 = vlaneseq
        %v1416 = vshrl.u32 %v1415, 7
        %v1417 = vsub.s32 %v1414, %v1416
        %v1418 = vrot.slane %v1411, %v1417
        %v1419 = vpack.c.bf16 %v1372, %v1372
        %v1421 = vunpack.c.l.s4 1983009808
        %v1422 = vunpack.c.0.s8 %v1421
        %v1423 = vlaneseq
        %v1424 = vshrl.u32 %v1423, 7
        %v1425 = vsub.s32 %v1422, %v1424
        %v1426 = vrot.slane %v1419, %v1425
        %v1427 = vcombine.low %v1418, %v1426
        %v1428 = vcombine.high %v1418, %v1426
        %v1430 = vunpack.c.l.s4 1934713408
        %v1431 = vunpack.c.0.s8 %v1430
        %v1432 = vlaneseq
        %v1433 = vshrl.u32 %v1432, 7
        %v1434 = vsub.s32 %v1431, %v1433
        %v1435 = vrot.slane %v1427, %v1434
        %v1437 = vunpack.c.l.s4 1934713408
        %v1438 = vunpack.c.0.s8 %v1437
        %v1439 = vlaneseq
        %v1440 = vshrl.u32 %v1439, 7
        %v1441 = vsub.s32 %v1438, %v1440
        %v1442 = vrot.slane %v1428, %v1441
        %v1443 = vcombine.high %v1435, 0
        %v1444 = vcombine.high %v1442, 0
        %v1447 = vpack.i.b16 %v1435, %v1401
        %v1449 = vshrl.u32 %v1401, 16
        %v1450 = vshrl.u32 %v1435, 16
        %v1451 = vpack.i.b16 %v1450, %v1449
        %v1455 = vpack.i.b16 %v1443, %v1409
        %v1457 = vshrl.u32 %v1409, 16
        %v1458 = vshrl.u32 %v1443, 16
        %v1459 = vpack.i.b16 %v1458, %v1457
        %v1463 = vpack.i.b16 %v1442, %v1408
        %v1465 = vshrl.u32 %v1408, 16
        %v1466 = vshrl.u32 %v1442, 16
        %v1467 = vpack.i.b16 %v1466, %v1465
        %v1471 = vpack.i.b16 %v1444, %v1410
        %v1473 = vshrl.u32 %v1410, 16
        %v1474 = vshrl.u32 %v1444, 16
        %v1475 = vpack.i.b16 %v1474, %v1473
        %v1477 = vcombine.low %v1447, %v1463
        %v1479 = vunpack.c.l.s4 1983009808
        %v1480 = vunpack.c.0.s8 %v1479
        %v1481 = vlaneseq
        %v1482 = vshrl.u32 %v1481, 7
        %v1483 = vsub.s32 %v1480, %v1482
        %v1484 = vrot.slane %v1477, %v1483
        %v1485 = vcombine.low %v1455, %v1471
        %v1487 = vunpack.c.l.s4 1983009808
        %v1488 = vunpack.c.0.s8 %v1487
        %v1489 = vlaneseq
        %v1490 = vshrl.u32 %v1489, 7
        %v1491 = vsub.s32 %v1488, %v1490
        %v1492 = vrot.slane %v1485, %v1491
        %v1493 = vcombine.low %v1484, %v1492
        %v1495 = vunpack.c.l.s4 1934713408
        %v1496 = vunpack.c.0.s8 %v1495
        %v1497 = vlaneseq
        %v1498 = vshrl.u32 %v1497, 7
        %v1499 = vsub.s32 %v1496, %v1498
        %v1500 = vrot.slane %v1493, %v1499
        %v1501 = vcombine.high %v1500, 0
        %v1502 = vcombine.low %v1451, %v1467
        %v1504 = vunpack.c.l.s4 1983009808
        %v1505 = vunpack.c.0.s8 %v1504
        %v1506 = vlaneseq
        %v1507 = vshrl.u32 %v1506, 7
        %v1508 = vsub.s32 %v1505, %v1507
        %v1509 = vrot.slane %v1502, %v1508
        %v1510 = vcombine.low %v1459, %v1475
        %v1512 = vunpack.c.l.s4 1983009808
        %v1513 = vunpack.c.0.s8 %v1512
        %v1514 = vlaneseq
        %v1515 = vshrl.u32 %v1514, 7
        %v1516 = vsub.s32 %v1513, %v1515
        %v1517 = vrot.slane %v1510, %v1516
        %v1518 = vcombine.low %v1509, %v1517
        %v1520 = vunpack.c.l.s4 1934713408
        %v1521 = vunpack.c.0.s8 %v1520
        %v1522 = vlaneseq
        %v1523 = vshrl.u32 %v1522, 7
        %v1524 = vsub.s32 %v1521, %v1523
        %v1525 = vrot.slane %v1518, %v1524
        %v1526 = vcombine.high %v1525, 0
        %v1529 = vpack.i.b16 %v1525, %v1500
        %v1530 = vshrl.u32 %v1500, 16
        %v1531 = vshrl.u32 %v1525, 16
        %v1532 = vpack.i.b16 %v1531, %v1530
        %v1535 = vpack.i.b16 %v1526, %v1501
        %v1536 = vshrl.u32 %v1501, 16
        %v1537 = vshrl.u32 %v1526, 16
        %v1538 = vpack.i.b16 %v1537, %v1536
        %1539 = vrot.lane.b32.xlu0 %v1532, 8
        %v1540 = vpop.permute.xlu0 %1539
        %1541 = vrot.lane.b32.xlu0 %v1535, 16
        %v1542 = vpop.permute.xlu0 %1541
        %1543 = vrot.lane.b32.xlu0 %v1538, 24
        %v1544 = vpop.permute.xlu0 %1543
        %v1547 = vsel %vm959, %v1529, %v1540
        %vm1548 = vcmask 130048
        %v1550 = vsel %vm1548, %v1547, %v1542
        %vm1551 = vcmask 195584
        %v1553 = vsel %vm1551, %v1550, %v1544
        %v1554 = vld [vmem:[%s6] sm:$0xf]
        %v1555 = vld [vmem:[%s6 + $0x4] sm:$0xf]
        %v1556 = vld [vmem:[%s6 + $0x8] sm:$0xf]
        %v1557 = vld [vmem:[%s6 + $0xc] sm:$0xf]
        %v1558 = vld [vmem:[%s7] sm:$0x1]
        %v1560 = vlaneseq
        %v1561 = vshrl.u32 %v1560, 7
        %v1562 = vsub.s32 0, %v1561
        %v1563 = vrot.slane %v1558, %v1562
        %v1569 = vunpack.c.l.b16 %v1554
        %v1570 = vunpack.c.l.b16 %v1555
        %v1571 = vunpack.c.l.b16 %v1556
        %v1572 = vunpack.c.l.b16 %v1557
        %v1573 = vpack.c.b16 %v1570, %v1569
        %v1574 = vpack.c.b16 %v1572, %v1571
        %v1577 = vsel %vm352, %v1553, 0
        %1579 = vmatprep.subr.bf16.mxu0 0
        %1580 = vmatpush1.bf16.msra.mxu0 %v1573
        %1581 = vmatprep.subr.bf16.mxu0 0
        %1582 = vmatpush1.bf16.msra.mxu0 %v1574
        %1583 = vmatprep.subr.bf16.mxu0 0
        %1584 = vmatpush1.bf16.msra.mxu0 0
        %1585 = vmatprep.subr.bf16.mxu0 0
        %1586 = vmatpush1.bf16.msra.mxu0 0
        %1587 = vmatprep.subr.bf16.mxu0 0
        %1588 = vmatpush1.bf16.msra.mxu0 0
        %1589 = vmatprep.subr.bf16.mxu0 0
        %1590 = vmatpush1.bf16.msra.mxu0 0
        %1591 = vmatprep.subr.bf16.mxu0 0
        %1592 = vmatpush1.bf16.msra.mxu0 0
        %1593 = vmatprep.subr.bf16.mxu0 0
        %1594 = vmatpush1.bf16.msra.mxu0 0
        %1595 = vmatprep.subr.bf16.mxu0 0
        %1596 = vmatpush1.bf16.msra.mxu0 0
        %1597 = vmatprep.subr.bf16.mxu0 0
        %1598 = vmatpush1.bf16.msra.mxu0 0
        %1599 = vmatprep.subr.bf16.mxu0 0
        %1600 = vmatpush1.bf16.msra.mxu0 0
        %1601 = vmatprep.subr.bf16.mxu0 0
        %1602 = vmatpush1.bf16.msra.mxu0 0
        %1603 = vmatprep.subr.bf16.mxu0 0
        %1604 = vmatpush1.bf16.msra.mxu0 0
        %1605 = vmatprep.subr.bf16.mxu0 0
        %1606 = vmatpush1.bf16.msra.mxu0 0
        %1607 = vmatprep.subr.bf16.mxu0 0
        %1608 = vmatpush1.bf16.msra.mxu0 0
        %1609 = vmatprep.subr.bf16.mxu0 0
        %1610 = vmatpush1.bf16.msra.mxu0 0
        %1611 = vmatprep.mubr.bf16.mxu0 0
        %1612 = vmatmul.mubr.bf16.gmra.mrb[0].mxu0 %v1577
        %v1613 = vpop.f32.mrb[0].mxu0
        %v1614 = vadd.f32 %v1563, %v1613
        %v1615 = vpop.f32.mrb[0].mxu0
        %v1616 = vpop.f32.mrb[0].mxu0
        %v1617 = vpop.f32.mrb[0].mxu0
        %1618 = vdwg.mxu0
        %v1619 = vadd.f32 %v1614, %v351
        %1620 = vst.msk [vmem:[%s347] sm:$0xff] %vm352, %v1619
        %s1621 = sand.u32 %s207, 1
        %s1622 = scalar_lea.sflag [#allocation4], %s1621
        %s1623 = sand.u32 %s207, 1
        %s1624 = smul.addr %s1623, 8
        %s1625 = scalar_lea.vmem [#allocation8], %s1624
        // Predicated region
        $region65: #{tpu_custom_call.1} parent=51 // pred_check
          %p1626 = pneg %p217
        $region66: #{tpu_custom_call.1} parent=51 // pred_check_branch
          %1628 = sbr.rel (%p1626) target = $region68
        $region67: #{tpu_custom_call.1} parent=51 // pred_region
          %s1630 = ssub.s32 128, 128
          %1631 = vsyncadd %s1622, %s1630
          %s1632 = smul.addr %s26, 128
          %s1633 = scalar_lea.hbm %s8, %s1632
          %s1635 = sshll.u32 %s1625, 4
          %s1636 = int_to_ptr.vmem [resolvable:$true] %s1635
          %1638 = dma.vmem_to_hbm [thread:$0]  %s1636, 128, %s1633, %s1622
        $region68: #{tpu_custom_call.1} parent=51 // pred_fallthru
          _
      $region52: #{tpu_custom_call.1} parent=5 // pred_fallthru
        _
      %p1639 = scmp.le.s32.totalorder 2, %s21
      // Predicated region
      $region69: #{tpu_custom_call.1} parent=5 // pred_check
        %p1640 = pneg %p1639
      $region70: #{tpu_custom_call.1} parent=5 // pred_check_branch
        %1642 = sbr.rel (%p1640) target = $region72
      $region71: #{tpu_custom_call.1} parent=5 // pred_region
        %s1643 = ssub.s32 %s21, 2
        // Predicated region
        $region73: #{tpu_custom_call.1} parent=71 // pred_check
          %p1644 = pneg %p223
        $region74: #{tpu_custom_call.1} parent=71 // pred_check_branch
          %1646 = sbr.rel (%p1644) target = $region76
        $region75: #{tpu_custom_call.1} parent=71 // pred_region
          %s1647 = sand.u32 %s208, 1
          %s1648 = scalar_lea.sflag [#allocation4], %s1647
          %s1649 = sand.u32 %s208, 1
          %s1650 = smul.addr %s1649, 8
          %s1651 = scalar_lea.vmem [#allocation8], %s1650
          %1652 = dma.done %s1648, 128
        $region76: #{tpu_custom_call.1} parent=71 // pred_fallthru
          _
      $region72: #{tpu_custom_call.1} parent=5 // pred_fallthru
        _
    $region6: #{tpu_custom_call.1} parent=1 // loop_footer
      %s25 = sadd.s32 1, %s21
    $region7: #{tpu_custom_call.1} parent=1 // loop_footer_branch
      %20 = sbr.rel target = $region3
    $region8: #{tpu_custom_call.1} parent=1 // loop_exit
      _
    %1653 = vsyncpa [#allocation3], 1
    %s1654 = scalar_lea.sflag [#allocation3], 1
    %1655 = vsyncpa %s1654, 1
    %1656 = vsyncpa [#allocation6], 1
    %1657 = vsyncpa [#allocation4], 1
    %s1658 = scalar_lea.sflag [#allocation4], 1
    %1659 = vsyncpa %s1658, 1

</llo_original>
